<compile_context>
chip_gen: v7x
topology: tpu7x:2x2x1
jax: 0.10.0
libtpu: 0.0.40
codegen_flags: <defaults>
</compile_context>

<pallas_src>
import jax
import jax.numpy as jnp
from jax.experimental import pallas as pl
from jax.experimental.pallas import tpu as pltpu

LEAK = 0.2
HID1, HID2, HID3, OUT = 512, 256, 128, 1


def discriminator_kernel(x_ref,
                         w1_ref, b1_ref,
                         w2_ref, b2_ref,
                         w3_ref, b3_ref,
                         w4_ref, b4_ref,
                         o_ref):
    def linear_lrelu(h_bf16, w_ref, b_ref):
        # MXU matmul with f32 accumulation; bf16 epilogue (bias + LeakyReLU).
        acc = jnp.dot(h_bf16, w_ref[...], preferred_element_type=jnp.float32)
        h = acc.astype(jnp.bfloat16) + b_ref[...]
        return jnp.maximum(h, LEAK * h)          # LeakyReLU(0.2), 0 < slope < 1

    x = x_ref[...].astype(jnp.bfloat16)          # no-op when x is fed as bf16
    h = linear_lrelu(x, w1_ref, b1_ref)          # (tile, 512); Dropout = identity (eval)
    h = linear_lrelu(h, w2_ref, b2_ref)          # (tile, 256)
    h = linear_lrelu(h, w3_ref, b3_ref)          # (tile, 128)

    # Final Linear(128,1) + Sigmoid: contract the (1,128) w4 row against h's
    # feature axis -> lane-dense (1, tile) block (batch on lanes), so the
    # store is a full-width vst (masked only on the ragged last block).
    logit = jax.lax.dot_general(
        w4_ref[...], h,
        dimension_numbers=(((1,), (1,)), ((), ())),
        preferred_element_type=jnp.float32)
    o_ref[...] = jax.nn.sigmoid(logit + b4_ref[0, 0]).astype(o_ref.dtype)


def _rep(i):
    # Constant index map: weights/biases stay VMEM-resident across the grid.
    return (0, 0)


def _const_spec(shape):
    """VMEM-resident constant operand; single-buffered when supported."""
    try:
        return pl.BlockSpec(shape, _rep, pipeline_mode=pl.Buffered(1))
    except (TypeError, AttributeError):  # older jax without pipeline_mode
        return pl.BlockSpec(shape, _rep)


def _select_batch_tile(B):
    # Big tiles amortize per-grid-step overhead, but keep >= 2 steps when
    # possible so both v7x TensorCores get work via the "parallel" grid axis.
    tile = 1024
    while tile > 256 and pl.cdiv(B, tile) < 2:
        tile //= 2
    return tile


def _vmem_limit_bytes(batch_tile, F, x_itemsize):
    x_blocks = 2 * batch_tile * F * x_itemsize                         # double-buffered x
    weights = 2 * (F * HID1 + HID1 * HID2 + HID2 * HID3 + HID3 * OUT)  # bf16, 1-buffered
    biases = 2 * (HID1 + HID2 + HID3)                                  # bf16
    out_blocks = 2 * 8 * batch_tile * 4                                # (1,tile) f32, padded
    inter = batch_tile * (HID1 + HID2 + HID3) * (4 + 2)                # f32 acc + bf16 acts
    total = x_blocks + weights + biases + out_blocks + inter
    limit = int(1.5 * total) + (8 << 20)                               # headroom for scratch
    return max(24 << 20, min(limit, 56 << 20))  # stay under v7x's 64 MiB physical VMEM


def discriminator_forward(z, params, *, batch_tile=None):
    """z: (B, in_features) float (bf16 preferred). params: prepare_params output.
    Returns (B, 1) float32 probabilities. batch_tile, if given, must be a
    multiple of 256."""
    w1, b1, w2, b2, w3, b3, w4row, b4 = params
    B, F = z.shape
    assert w1.shape[0] == F, "in_features mismatch"

    tile = batch_tile if batch_tile is not None else _select_batch_tile(B)
    num_tiles = pl.cdiv(B, tile)  # ragged last block handled by Pallas masking

    in_specs = [
        pl.BlockSpec((tile, F), lambda i: (i, 0)),
        _const_spec(w1.shape), _const_spec(b1.shape),
        _const_spec(w2.shape), _const_spec(b2.shape),
        _const_spec(w3.shape), _const_spec(b3.shape),
        _const_spec(w4row.shape),
        pl.BlockSpec(memory_space=pltpu.MemorySpace.SMEM),   # b4 scalar
    ]
    # Lane-dense output: one row, batch along lanes.
    out_spec = pl.BlockSpec((1, tile), lambda i: (0, i))

    out = pl.pallas_call(
        discriminator_kernel,
        out_shape=jax.ShapeDtypeStruct((1, B), jnp.float32),
        grid_spec=pltpu.PrefetchScalarGridSpec(
            num_scalar_prefetch=0,
            grid=(num_tiles,),
            in_specs=in_specs,
            out_specs=out_spec,
        ),
        compiler_params=pltpu.CompilerParams(
            dimension_semantics=("parallel",),
            vmem_limit_bytes=_vmem_limit_bytes(tile, F, z.dtype.itemsize),
        ),
    )(z, w1, b1, w2, b2, w3, b3, w4row, b4)

    return out.reshape(B, 1)


def init_params(key, in_features):
    """PyTorch nn.Linear-style init: U(-1/sqrt(fan_in), 1/sqrt(fan_in)).
    Returns f32 (w: (in, out), b: (1, out)) pairs (reference layout)."""
    dims = [(in_features, HID1), (HID1, HID2), (HID2, HID3), (HID3, OUT)]
    params = []
    for fan_in, fan_out in dims:
        key, kw, kb = jax.random.split(key, 3)
        bound = 1.0 / jnp.sqrt(jnp.float32(fan_in))
        w = jax.random.uniform(kw, (fan_in, fan_out), jnp.float32, -bound, bound)
        b = jax.random.uniform(kb, (1, fan_out), jnp.float32, -bound, bound)
        params.append((w, b))
    return params


def prepare_params(params):
    """One-time kernel-side param prep (hoisted out of the per-call path):
    bf16 MXU operands + bf16 biases for layers 1-3, w4 pre-transposed to a
    (1, 128) row, b4 kept as an f32 (1, 1) SMEM scalar."""
    (w1, b1), (w2, b2), (w3, b3), (w4, b4) = params
    bf = jnp.bfloat16
    return (w1.astype(bf), b1.astype(bf),
            w2.astype(bf), b2.astype(bf),
            w3.astype(bf), b3.astype(bf),
            w4.T.astype(bf), b4.astype(jnp.float32))


def reference_forward(z, params):
    h = z
    for idx, (w, b) in enumerate(params):
        h = h @ w + b
        if idx < 3:
            h = jnp.maximum(h, LEAK * h)
    return jax.nn.sigmoid(h)


if __name__ == "__main__":
    key = jax.random.PRNGKey(0)
    in_features = 64
    batch = 320   # not a multiple of the auto-selected 256 tile:
                  # exercises 2 grid steps + a masked ragged last block.

    kz, kp = jax.random.split(key)
    z_f32 = jax.random.normal(kz, (batch, in_features), jnp.float32)
    z = z_f32.astype(jnp.bfloat16)            # bf16 input stream to the kernel
    params = init_params(kp, in_features)
    prepared = prepare_params(params)          # one-time cast, not per forward

    out = discriminator_forward(z, prepared)
    out = jax.block_until_ready(out)

    # f32 reference fed the same (bf16-rounded) inputs.
    ref = reference_forward(z.astype(jnp.float32), params)
    assert out.shape == (batch, 1)
    # bf16 MXU operands + bf16 epilogue -> looser tolerance than pure f32.
    assert jnp.allclose(out, ref, atol=2.5e-2, rtol=0.0), "mismatch vs reference"
    assert bool(jnp.all((out >= 0.0) & (out <= 1.0))), "sigmoid range violated"

    print("KERNEL_OK")
</pallas_src>

<mosaic_0001>
module attributes {stable_mosaic.version = 11 : i64} {
  func.func @discriminator_kernel(%arg0: i32, %arg1: memref<256x64xbf16, #tpu.memory_space<vmem>>, %arg2: memref<64x512xbf16, #tpu.memory_space<vmem>>, %arg3: memref<1x512xbf16, #tpu.memory_space<vmem>>, %arg4: memref<512x256xbf16, #tpu.memory_space<vmem>>, %arg5: memref<1x256xbf16, #tpu.memory_space<vmem>>, %arg6: memref<256x128xbf16, #tpu.memory_space<vmem>>, %arg7: memref<1x128xbf16, #tpu.memory_space<vmem>>, %arg8: memref<1x128xbf16, #tpu.memory_space<vmem>>, %arg9: memref<1x1xf32, #tpu.memory_space<smem>>, %arg10: memref<1x256xf32, #tpu.memory_space<vmem>>) attributes {dimension_semantics = [#tpu.dimension_semantics<parallel>], iteration_bounds = array<i64: 2>, scalar_prefetch = 0 : i64, scratch_operands = 0 : i64, tpu.core_type = #tpu.core_type<tc>, window_params = [{transform_indices = @transform_0, window_bounds = array<i64: 256, 64>}, {pipeline_mode = #tpu.pipeline_mode<synchronous>, transform_indices = @transform_1, window_bounds = array<i64: 64, 512>}, {pipeline_mode = #tpu.pipeline_mode<synchronous>, transform_indices = @transform_2, window_bounds = array<i64: 1, 512>}, {pipeline_mode = #tpu.pipeline_mode<synchronous>, transform_indices = @transform_3, window_bounds = array<i64: 512, 256>}, {pipeline_mode = #tpu.pipeline_mode<synchronous>, transform_indices = @transform_4, window_bounds = array<i64: 1, 256>}, {pipeline_mode = #tpu.pipeline_mode<synchronous>, transform_indices = @transform_5, window_bounds = array<i64: 256, 128>}, {pipeline_mode = #tpu.pipeline_mode<synchronous>, transform_indices = @transform_6, window_bounds = array<i64: 1, 128>}, {pipeline_mode = #tpu.pipeline_mode<synchronous>, transform_indices = @transform_7, window_bounds = array<i64: 1, 128>}, {transform_indices = @transform_8, window_bounds = array<i64: 1, 1>}, {transform_indices = @transform_9, window_bounds = array<i64: 1, 256>}]} {
    %c0 = arith.constant 0 : index
    %c0_0 = arith.constant 0 : index
    %0 = vector.load %arg1[%c0, %c0_0] : memref<256x64xbf16, #tpu.memory_space<vmem>>, vector<256x64xbf16>
    %c0_1 = arith.constant 0 : index
    %c0_2 = arith.constant 0 : index
    %1 = vector.load %arg2[%c0_1, %c0_2] : memref<64x512xbf16, #tpu.memory_space<vmem>>, vector<64x512xbf16>
    %cst = arith.constant dense<0.000000e+00> : vector<256x512xf32>
    %2 = tpu.matmul %0, %1, %cst {dimension_numbers = #tpu.dot_dimension_numbers<[1], [0], [0], [1], [0, 0, 1, 1], [], []>} : vector<256x64xbf16>, vector<64x512xbf16>, vector<256x512xf32> -> vector<256x512xf32>
    %3 = arith.truncf %2 : vector<256x512xf32> to vector<256x512xbf16>
    %c0_3 = arith.constant 0 : index
    %c0_4 = arith.constant 0 : index
    %4 = vector.load %arg3[%c0_3, %c0_4] : memref<1x512xbf16, #tpu.memory_space<vmem>>, vector<1x512xbf16>
    %5 = vector.broadcast %4 : vector<1x512xbf16> to vector<256x512xbf16>
    %6 = arith.addf %3, %5 : vector<256x512xbf16>
    %cst_5 = arith.constant 2.001950e-01 : bf16
    %7 = vector.broadcast %cst_5 : bf16 to vector<256x512xbf16>
    %8 = arith.mulf %7, %6 : vector<256x512xbf16>
    %9 = arith.maximumf %6, %8 : vector<256x512xbf16>
    %c0_6 = arith.constant 0 : index
    %c0_7 = arith.constant 0 : index
    %10 = vector.load %arg4[%c0_6, %c0_7] : memref<512x256xbf16, #tpu.memory_space<vmem>>, vector<512x256xbf16>
    %cst_8 = arith.constant dense<0.000000e+00> : vector<256x256xf32>
    %11 = tpu.matmul %9, %10, %cst_8 {dimension_numbers = #tpu.dot_dimension_numbers<[1], [0], [0], [1], [0, 0, 1, 1], [], []>} : vector<256x512xbf16>, vector<512x256xbf16>, vector<256x256xf32> -> vector<256x256xf32>
    %12 = arith.truncf %11 : vector<256x256xf32> to vector<256x256xbf16>
    %c0_9 = arith.constant 0 : index
    %c0_10 = arith.constant 0 : index
    %13 = vector.load %arg5[%c0_9, %c0_10] : memref<1x256xbf16, #tpu.memory_space<vmem>>, vector<1x256xbf16>
    %14 = vector.broadcast %13 : vector<1x256xbf16> to vector<256x256xbf16>
    %15 = arith.addf %12, %14 : vector<256x256xbf16>
    %cst_11 = arith.constant 2.001950e-01 : bf16
    %16 = vector.broadcast %cst_11 : bf16 to vector<256x256xbf16>
    %17 = arith.mulf %16, %15 : vector<256x256xbf16>
    %18 = arith.maximumf %15, %17 : vector<256x256xbf16>
    %c0_12 = arith.constant 0 : index
    %c0_13 = arith.constant 0 : index
    %19 = vector.load %arg6[%c0_12, %c0_13] : memref<256x128xbf16, #tpu.memory_space<vmem>>, vector<256x128xbf16>
    %cst_14 = arith.constant dense<0.000000e+00> : vector<256x128xf32>
    %20 = tpu.matmul %18, %19, %cst_14 {dimension_numbers = #tpu.dot_dimension_numbers<[1], [0], [0], [1], [0, 0, 1, 1], [], []>} : vector<256x256xbf16>, vector<256x128xbf16>, vector<256x128xf32> -> vector<256x128xf32>
    %21 = arith.truncf %20 : vector<256x128xf32> to vector<256x128xbf16>
    %c0_15 = arith.constant 0 : index
    %c0_16 = arith.constant 0 : index
    %22 = vector.load %arg7[%c0_15, %c0_16] : memref<1x128xbf16, #tpu.memory_space<vmem>>, vector<1x128xbf16>
    %23 = vector.broadcast %22 : vector<1x128xbf16> to vector<256x128xbf16>
    %24 = arith.addf %21, %23 : vector<256x128xbf16>
    %cst_17 = arith.constant 2.001950e-01 : bf16
    %25 = vector.broadcast %cst_17 : bf16 to vector<256x128xbf16>
    %26 = arith.mulf %25, %24 : vector<256x128xbf16>
    %27 = arith.maximumf %24, %26 : vector<256x128xbf16>
    %c0_18 = arith.constant 0 : index
    %c0_19 = arith.constant 0 : index
    %28 = vector.load %arg8[%c0_18, %c0_19] : memref<1x128xbf16, #tpu.memory_space<vmem>>, vector<1x128xbf16>
    %cst_20 = arith.constant dense<0.000000e+00> : vector<1x256xf32>
    %29 = tpu.matmul %28, %27, %cst_20 {dimension_numbers = #tpu.dot_dimension_numbers<[1], [1], [0], [0], [0, 0, 1, 0], [], []>} : vector<1x128xbf16>, vector<256x128xbf16>, vector<1x256xf32> -> vector<1x256xf32>
    %c0_21 = arith.constant 0 : index
    %c0_22 = arith.constant 0 : index
    %30 = memref.load %arg9[%c0_21, %c0_22] : memref<1x1xf32, #tpu.memory_space<smem>>
    %31 = vector.broadcast %30 : f32 to vector<1x256xf32>
    %32 = arith.addf %29, %31 : vector<1x256xf32>
    %33 = arith.negf %32 : vector<1x256xf32>
    %34 = math.exp %33 : vector<1x256xf32>
    %cst_23 = arith.constant 1.000000e+00 : f32
    %35 = vector.broadcast %cst_23 : f32 to vector<1x256xf32>
    %36 = arith.addf %35, %34 : vector<1x256xf32>
    %37 = arith.divf %35, %36 : vector<1x256xf32>
    %c0_24 = arith.constant 0 : index
    %c0_25 = arith.constant 0 : index
    %38 = vector.load %arg10[%c0_24, %c0_25] : memref<1x256xf32, #tpu.memory_space<vmem>>, vector<1x256xf32>
    tpu.vector_store %arg10[%c0_24, %c0_25], %37 {strides = array<i32>} : memref<1x256xf32, #tpu.memory_space<vmem>>, vector<1x256xf32>,
    return
  }
  func.func @transform_0(%arg0: i32) -> (i32, i32) {
    %c0_i32 = arith.constant 0 : i32
    %c0_i32_0 = arith.constant 0 : i32
    return %arg0, %c0_i32 : i32, i32
  }
  func.func @transform_1(%arg0: i32) -> (i32, i32) {
    %c0_i32 = arith.constant 0 : i32
    %c0_i32_0 = arith.constant 0 : i32
    %c0_i32_1 = arith.constant 0 : i32
    return %c0_i32, %c0_i32_0 : i32, i32
  }
  func.func @transform_2(%arg0: i32) -> (i32, i32) {
    %c0_i32 = arith.constant 0 : i32
    %c0_i32_0 = arith.constant 0 : i32
    %c0_i32_1 = arith.constant 0 : i32
    return %c0_i32, %c0_i32_0 : i32, i32
  }
  func.func @transform_3(%arg0: i32) -> (i32, i32) {
    %c0_i32 = arith.constant 0 : i32
    %c0_i32_0 = arith.constant 0 : i32
    %c0_i32_1 = arith.constant 0 : i32
    return %c0_i32, %c0_i32_0 : i32, i32
  }
  func.func @transform_4(%arg0: i32) -> (i32, i32) {
    %c0_i32 = arith.constant 0 : i32
    %c0_i32_0 = arith.constant 0 : i32
    %c0_i32_1 = arith.constant 0 : i32
    return %c0_i32, %c0_i32_0 : i32, i32
  }
  func.func @transform_5(%arg0: i32) -> (i32, i32) {
    %c0_i32 = arith.constant 0 : i32
    %c0_i32_0 = arith.constant 0 : i32
    %c0_i32_1 = arith.constant 0 : i32
    return %c0_i32, %c0_i32_0 : i32, i32
  }
  func.func @transform_6(%arg0: i32) -> (i32, i32) {
    %c0_i32 = arith.constant 0 : i32
    %c0_i32_0 = arith.constant 0 : i32
    %c0_i32_1 = arith.constant 0 : i32
    return %c0_i32, %c0_i32_0 : i32, i32
  }
  func.func @transform_7(%arg0: i32) -> (i32, i32) {
    %c0_i32 = arith.constant 0 : i32
    %c0_i32_0 = arith.constant 0 : i32
    %c0_i32_1 = arith.constant 0 : i32
    return %c0_i32, %c0_i32_0 : i32, i32
  }
  func.func @transform_8(%arg0: i32) -> (i32, i32) {
    %c0_i32 = arith.constant 0 : i32
    %c0_i32_0 = arith.constant 0 : i32
    %c0_i32_1 = arith.constant 0 : i32
    return %c0_i32, %c0_i32_0 : i32, i32
  }
  func.func @transform_9(%arg0: i32) -> (i32, i32) {
    %c0_i32 = arith.constant 0 : i32
    %c0_i32_0 = arith.constant 0 : i32
    return %c0_i32, %arg0 : i32, i32
  }
}

</mosaic_0001>

<llo_original>
// kernel: tpu_custom_call.1
$region0: #{tpu_custom_call.1}
  #allocation0 [shape = 'u32[]', space=smem, size = 0x4, offset = 0x4, fixed_abs, tag = 'smem constant byte address 0x4 - core index']
  #allocation1 [shape = 'u32[144,128]{1,0:T(1,128)}', space=vmem, size = 0x12000, scoped, tag = 'internal scratch']
  #allocation2 [shape = 'f32[1,1]{1,0:T(1,128)S(6)}', space=smem, size = 0x200, scoped, tag = 'scoped memory for tpu_custom_call.1']
  %s0 = inlined_call_operand.vmem [shape: bf16[320,64], index: 0, kind: input, shape index: {}]
  %s1 = inlined_call_operand.vmem [shape: bf16[64,512], index: 1, kind: input, shape index: {}]
  %s2 = inlined_call_operand.vmem [shape: bf16[1,512], index: 2, kind: input, shape index: {}]
  %s3 = inlined_call_operand.hbm [shape: bf16[512,256], index: 3, kind: input, shape index: {}]
  %s4 = inlined_call_operand.vmem [shape: bf16[1,256], index: 4, kind: input, shape index: {}]
  %s5 = inlined_call_operand.vmem [shape: bf16[256,128], index: 5, kind: input, shape index: {}]
  %s6 = inlined_call_operand.vmem [shape: bf16[1,128], index: 6, kind: input, shape index: {}]
  %s7 = inlined_call_operand.vmem [shape: bf16[1,128], index: 7, kind: input, shape index: {}]
  %s8 = inlined_call_operand.<no memory space> [shape: f32[1,1], index: 8, kind: input, shape index: {}]
  %s9 = inlined_call_operand.hbm [shape: f32[1,320], index: 9, kind: output, shape index: {}]
  %s10 = sld [smem:[#allocation0]]
  $region73: #{tpu_custom_call.1} parent=0
    _
  %s12 = ssub.s32 1, %s10
  %s13 = scalar_select 0, %s12, %s10
  %14 = sst [smem:[#allocation2]] %s8
  $region1: #{tpu_custom_call.1} parent=0
    #allocation3 [shape = 'u8[262144]{0}', space=vmem, size = 0x40000, scoped, tag = 'input window, operand 3, single buffered']
    #allocation4 [shape = 's32[2]{0}', space=sflag, size = 0x8, scoped, tag = 'scoped memory for tpu_custom_call.1']
    #allocation5 [shape = 's32[2]{0}', space=sflag, size = 0x8, scoped, tag = 'scoped memory for tpu_custom_call.1']
    #allocation6 [shape = 'u8[2048]{0}', space=vmem, size = 0x800, scoped, tag = 'output window, operand 0']
    %15 = vsyncpa [#allocation4], 0
    %16 = vsyncpa [#allocation5], 0
    %s17 = scalar_lea.sflag [#allocation5], 1
    %18 = vsyncpa %s17, 0
    loop: start=0, step=1, limit=4
    $region2: #{tpu_custom_call.1} parent=1 // loop_pre_header
      _
    $region3: #{tpu_custom_call.1} parent=1 // loop_header
      %s20 = sphi 0, %s24
      %p21 = scmp.ge.s32.totalorder %s20, 4
      %s30 = sphi 0, %s32
      %s33 = sphi 0, %s30
      %s34 = sphi 0, %s33
      %s50 = sphi 0, %s34
      %s54 = sphi 0, %s54
      %s56 = sphi 0, %s54
      %s57 = sphi 0, %s56
      %s71 = sphi 0, %s57
      %s75 = sphi 0, %s75
      %s77 = sphi 0, %s75
      %s78 = sphi 0, %s77
      %s92 = sphi 0, %s78
      %s96 = sphi 0, %s96
      %s98 = sphi 0, %s96
      %s99 = sphi 0, %s98
      %s113 = sphi 0, %s99
      %s117 = sphi 0, %s117
      %s119 = sphi 0, %s117
      %s120 = sphi 0, %s119
      %s134 = sphi 0, %s120
      %s138 = sphi 0, %s138
      %s140 = sphi 0, %s138
      %s141 = sphi 0, %s140
      %s155 = sphi 0, %s141
      %s159 = sphi 0, %s159
      %s161 = sphi 0, %s159
      %s162 = sphi 0, %s161
      %s176 = sphi 0, %s162
      %s180 = sphi 0, %s180
      %s182 = sphi 0, %s180
      %s183 = sphi 0, %s182
      %s197 = sphi 0, %s183
      %s201 = sphi 0, %s201
      %s203 = sphi 0, %s201
      %s204 = sphi 0, %s203
      %s218 = sphi 0, %s204
      %s224 = sphi 0, %s226
      %s227 = sphi 0, %s224
      %s228 = sphi 0, %s227
      %s244 = sphi 0, %s228
    $region4: #{tpu_custom_call.1} parent=1 // loop_header_branch
      %23 = sbr.rel (%p21) target = $region8
    $region5: #{tpu_custom_call.1} parent=1 // loop_body
      %s25 = ssub.s32 %s20, 1
      %s26 = ssub.s32 %s20, 2
      %s27 = sadd.s32 %s20, 1
      %s28 = ssub.s32 %s20, %s27
      %p29 = scmp.eq.s32.totalorder %s28, 0
      %s31 = sadd.s32 %s30, 1
      %s32 = scalar_select %p29, %s30, %s31
      %p35 = pneg %p29
      %p36 = scmp.eq.s32.totalorder %s20, 1
      %p37 = por %p35, %p36
      %p38 = scmp.ne.s32.totalorder %s30, %s33
      %p39 = scmp.eq.s32.totalorder %s20, 0
      %p40 = por %p38, %p39
      %p41 = scmp.ne.s32.totalorder %s30, %s33
      %p42 = scmp.eq.s32.totalorder %s25, 1
      %p43 = por %p41, %p42
      %p44 = scmp.ne.s32.totalorder %s33, %s34
      %p45 = scmp.eq.s32.totalorder %s25, 0
      %p46 = por %p44, %p45
      %p47 = scmp.ne.s32.totalorder %s33, %s34
      %p48 = scmp.eq.s32.totalorder %s26, 1
      %p49 = por %p47, %p48
      %p51 = scmp.ne.s32.totalorder %s34, %s50
      %p52 = scmp.eq.s32.totalorder %s26, 0
      %p53 = por %p51, %p52
      %s55 = sadd.s32 %s54, 1
      %p58 = scmp.eq.s32.totalorder %s20, 1
      %p59 = scmp.ne.s32.totalorder %s54, %s56
      %p60 = scmp.eq.s32.totalorder %s20, 0
      %p61 = por %p59, %p60
      %p62 = scmp.ne.s32.totalorder %s54, %s56
      %p63 = scmp.eq.s32.totalorder %s25, 1
      %p64 = por %p62, %p63
      %p65 = scmp.ne.s32.totalorder %s56, %s57
      %p66 = scmp.eq.s32.totalorder %s25, 0
      %p67 = por %p65, %p66
      %p68 = scmp.ne.s32.totalorder %s56, %s57
      %p69 = scmp.eq.s32.totalorder %s26, 1
      %p70 = por %p68, %p69
      %p72 = scmp.ne.s32.totalorder %s57, %s71
      %p73 = scmp.eq.s32.totalorder %s26, 0
      %p74 = por %p72, %p73
      %s76 = sadd.s32 %s75, 1
      %p79 = scmp.eq.s32.totalorder %s20, 1
      %p80 = scmp.ne.s32.totalorder %s75, %s77
      %p81 = scmp.eq.s32.totalorder %s20, 0
      %p82 = por %p80, %p81
      %p83 = scmp.ne.s32.totalorder %s75, %s77
      %p84 = scmp.eq.s32.totalorder %s25, 1
      %p85 = por %p83, %p84
      %p86 = scmp.ne.s32.totalorder %s77, %s78
      %p87 = scmp.eq.s32.totalorder %s25, 0
      %p88 = por %p86, %p87
      %p89 = scmp.ne.s32.totalorder %s77, %s78
      %p90 = scmp.eq.s32.totalorder %s26, 1
      %p91 = por %p89, %p90
      %p93 = scmp.ne.s32.totalorder %s78, %s92
      %p94 = scmp.eq.s32.totalorder %s26, 0
      %p95 = por %p93, %p94
      %s97 = sadd.s32 %s96, 1
      %p100 = scmp.eq.s32.totalorder %s20, 1
      %p101 = scmp.ne.s32.totalorder %s96, %s98
      %p102 = scmp.eq.s32.totalorder %s20, 0
      %p103 = por %p101, %p102
      %p104 = scmp.ne.s32.totalorder %s96, %s98
      %p105 = scmp.eq.s32.totalorder %s25, 1
      %p106 = por %p104, %p105
      %p107 = scmp.ne.s32.totalorder %s98, %s99
      %p108 = scmp.eq.s32.totalorder %s25, 0
      %p109 = por %p107, %p108
      %p110 = scmp.ne.s32.totalorder %s98, %s99
      %p111 = scmp.eq.s32.totalorder %s26, 1
      %p112 = por %p110, %p111
      %p114 = scmp.ne.s32.totalorder %s99, %s113
      %p115 = scmp.eq.s32.totalorder %s26, 0
      %p116 = por %p114, %p115
      %s118 = sadd.s32 %s117, 1
      %p121 = scmp.eq.s32.totalorder %s20, 1
      %p122 = scmp.ne.s32.totalorder %s117, %s119
      %p123 = scmp.eq.s32.totalorder %s20, 0
      %p124 = por %p122, %p123
      %p125 = scmp.ne.s32.totalorder %s117, %s119
      %p126 = scmp.eq.s32.totalorder %s25, 1
      %p127 = por %p125, %p126
      %p128 = scmp.ne.s32.totalorder %s119, %s120
      %p129 = scmp.eq.s32.totalorder %s25, 0
      %p130 = por %p128, %p129
      %p131 = scmp.ne.s32.totalorder %s119, %s120
      %p132 = scmp.eq.s32.totalorder %s26, 1
      %p133 = por %p131, %p132
      %p135 = scmp.ne.s32.totalorder %s120, %s134
      %p136 = scmp.eq.s32.totalorder %s26, 0
      %p137 = por %p135, %p136
      %s139 = sadd.s32 %s138, 1
      %p142 = scmp.eq.s32.totalorder %s20, 1
      %p143 = scmp.ne.s32.totalorder %s138, %s140
      %p144 = scmp.eq.s32.totalorder %s20, 0
      %p145 = por %p143, %p144
      %p146 = scmp.ne.s32.totalorder %s138, %s140
      %p147 = scmp.eq.s32.totalorder %s25, 1
      %p148 = por %p146, %p147
      %p149 = scmp.ne.s32.totalorder %s140, %s141
      %p150 = scmp.eq.s32.totalorder %s25, 0
      %p151 = por %p149, %p150
      %p152 = scmp.ne.s32.totalorder %s140, %s141
      %p153 = scmp.eq.s32.totalorder %s26, 1
      %p154 = por %p152, %p153
      %p156 = scmp.ne.s32.totalorder %s141, %s155
      %p157 = scmp.eq.s32.totalorder %s26, 0
      %p158 = por %p156, %p157
      %s160 = sadd.s32 %s159, 1
      %p163 = scmp.eq.s32.totalorder %s20, 1
      %p164 = scmp.ne.s32.totalorder %s159, %s161
      %p165 = scmp.eq.s32.totalorder %s20, 0
      %p166 = por %p164, %p165
      %p167 = scmp.ne.s32.totalorder %s159, %s161
      %p168 = scmp.eq.s32.totalorder %s25, 1
      %p169 = por %p167, %p168
      %p170 = scmp.ne.s32.totalorder %s161, %s162
      %p171 = scmp.eq.s32.totalorder %s25, 0
      %p172 = por %p170, %p171
      %p173 = scmp.ne.s32.totalorder %s161, %s162
      %p174 = scmp.eq.s32.totalorder %s26, 1
      %p175 = por %p173, %p174
      %p177 = scmp.ne.s32.totalorder %s162, %s176
      %p178 = scmp.eq.s32.totalorder %s26, 0
      %p179 = por %p177, %p178
      %s181 = sadd.s32 %s180, 1
      %p184 = scmp.eq.s32.totalorder %s20, 1
      %p185 = scmp.ne.s32.totalorder %s180, %s182
      %p186 = scmp.eq.s32.totalorder %s20, 0
      %p187 = por %p185, %p186
      %p188 = scmp.ne.s32.totalorder %s180, %s182
      %p189 = scmp.eq.s32.totalorder %s25, 1
      %p190 = por %p188, %p189
      %p191 = scmp.ne.s32.totalorder %s182, %s183
      %p192 = scmp.eq.s32.totalorder %s25, 0
      %p193 = por %p191, %p192
      %p194 = scmp.ne.s32.totalorder %s182, %s183
      %p195 = scmp.eq.s32.totalorder %s26, 1
      %p196 = por %p194, %p195
      %p198 = scmp.ne.s32.totalorder %s183, %s197
      %p199 = scmp.eq.s32.totalorder %s26, 0
      %p200 = por %p198, %p199
      %s202 = sadd.s32 %s201, 1
      %p205 = scmp.eq.s32.totalorder %s20, 1
      %p206 = scmp.ne.s32.totalorder %s201, %s203
      %p207 = scmp.eq.s32.totalorder %s20, 0
      %p208 = por %p206, %p207
      %p209 = scmp.ne.s32.totalorder %s201, %s203
      %p210 = scmp.eq.s32.totalorder %s25, 1
      %p211 = por %p209, %p210
      %p212 = scmp.ne.s32.totalorder %s203, %s204
      %p213 = scmp.eq.s32.totalorder %s25, 0
      %p214 = por %p212, %p213
      %p215 = scmp.ne.s32.totalorder %s203, %s204
      %p216 = scmp.eq.s32.totalorder %s26, 1
      %p217 = por %p215, %p216
      %p219 = scmp.ne.s32.totalorder %s204, %s218
      %p220 = scmp.eq.s32.totalorder %s26, 0
      %p221 = por %p219, %p220
      %s222 = ssub.s32 %s20, %s27
      %p223 = scmp.eq.s32.totalorder %s222, 0
      %s225 = sadd.s32 %s224, 1
      %s226 = scalar_select %p223, %s224, %s225
      %p229 = pneg %p223
      %p230 = scmp.eq.s32.totalorder %s20, 1
      %p231 = por %p229, %p230
      %p232 = scmp.ne.s32.totalorder %s224, %s227
      %p233 = scmp.eq.s32.totalorder %s20, 0
      %p234 = por %p232, %p233
      %p235 = scmp.ne.s32.totalorder %s224, %s227
      %p236 = scmp.eq.s32.totalorder %s25, 1
      %p237 = por %p235, %p236
      %p238 = scmp.ne.s32.totalorder %s227, %s228
      %p239 = scmp.eq.s32.totalorder %s25, 0
      %p240 = por %p238, %p239
      %p241 = scmp.ne.s32.totalorder %s227, %s228
      %p242 = scmp.eq.s32.totalorder %s26, 1
      %p243 = por %p241, %p242
      %p245 = scmp.ne.s32.totalorder %s228, %s244
      %p246 = scmp.eq.s32.totalorder %s26, 0
      %p247 = por %p245, %p246
      %p248 = scmp.le.s32.totalorder 1, %s20
      %p249 = scmp.lt.s32.totalorder %s20, 3
      %p250 = pnand %p248, %p249
      %p251 = pneg %p250
      // Predicated region
      $region9: #{tpu_custom_call.1} parent=5 // pred_check
        _
      $region10: #{tpu_custom_call.1} parent=5 // pred_check_branch
        %253 = sbr.rel (%p250) target = $region12
      $region11: #{tpu_custom_call.1} parent=5 // pred_region
        %s254 = ssub.s32 %s20, 1
        // Predicated region
        $region13: #{tpu_custom_call.1} parent=11 // pred_check
          %p255 = pneg %p67
        $region14: #{tpu_custom_call.1} parent=11 // pred_check_branch
          %257 = sbr.rel (%p255) target = $region16
        $region15: #{tpu_custom_call.1} parent=11 // pred_region
          _
        $region16: #{tpu_custom_call.1} parent=11 // pred_fallthru
          _
        // Predicated region
        $region17: #{tpu_custom_call.1} parent=11 // pred_check
          %p258 = pneg %p88
        $region18: #{tpu_custom_call.1} parent=11 // pred_check_branch
          %260 = sbr.rel (%p258) target = $region20
        $region19: #{tpu_custom_call.1} parent=11 // pred_region
          _
        $region20: #{tpu_custom_call.1} parent=11 // pred_fallthru
          _
        // Predicated region
        $region21: #{tpu_custom_call.1} parent=11 // pred_check
          %p261 = pneg %p109
        $region22: #{tpu_custom_call.1} parent=11 // pred_check_branch
          %263 = sbr.rel (%p261) target = $region24
        $region23: #{tpu_custom_call.1} parent=11 // pred_region
          %s265 = ssub.s32 8192, 8192
          %266 = vsyncadd [#allocation4], %s265
          %s267 = sshll.u32 [#allocation3], 4
          %s268 = int_to_ptr.vmem [resolvable:$true] %s267
          %273 = dma.hbm_to_vmem [thread:$0]  %s3, 8192, %s268, [#allocation4], 128, 128, 8
        $region24: #{tpu_custom_call.1} parent=11 // pred_fallthru
          _
        // Predicated region
        $region25: #{tpu_custom_call.1} parent=11 // pred_check
          %p274 = pneg %p130
        $region26: #{tpu_custom_call.1} parent=11 // pred_check_branch
          %276 = sbr.rel (%p274) target = $region28
        $region27: #{tpu_custom_call.1} parent=11 // pred_region
          _
        $region28: #{tpu_custom_call.1} parent=11 // pred_fallthru
          _
        // Predicated region
        $region29: #{tpu_custom_call.1} parent=11 // pred_check
          %p277 = pneg %p151
        $region30: #{tpu_custom_call.1} parent=11 // pred_check_branch
          %279 = sbr.rel (%p277) target = $region32
        $region31: #{tpu_custom_call.1} parent=11 // pred_region
          _
        $region32: #{tpu_custom_call.1} parent=11 // pred_fallthru
          _
        // Predicated region
        $region33: #{tpu_custom_call.1} parent=11 // pred_check
          %p280 = pneg %p172
        $region34: #{tpu_custom_call.1} parent=11 // pred_check_branch
          %282 = sbr.rel (%p280) target = $region36
        $region35: #{tpu_custom_call.1} parent=11 // pred_region
          _
        $region36: #{tpu_custom_call.1} parent=11 // pred_fallthru
          _
        // Predicated region
        $region37: #{tpu_custom_call.1} parent=11 // pred_check
          %p283 = pneg %p193
        $region38: #{tpu_custom_call.1} parent=11 // pred_check_branch
          %285 = sbr.rel (%p283) target = $region40
        $region39: #{tpu_custom_call.1} parent=11 // pred_region
          _
        $region40: #{tpu_custom_call.1} parent=11 // pred_fallthru
          _
        // Predicated region
        $region41: #{tpu_custom_call.1} parent=11 // pred_check
          %p286 = pneg %p214
        $region42: #{tpu_custom_call.1} parent=11 // pred_check_branch
          %288 = sbr.rel (%p286) target = $region44
        $region43: #{tpu_custom_call.1} parent=11 // pred_region
          _
        $region44: #{tpu_custom_call.1} parent=11 // pred_fallthru
          _
      $region12: #{tpu_custom_call.1} parent=5 // pred_fallthru
        _
      %p289 = scmp.lt.s32.totalorder %s20, 2
      // Predicated region
      $region45: #{tpu_custom_call.1} parent=5 // pred_check
        %p290 = pneg %p289
      $region46: #{tpu_custom_call.1} parent=5 // pred_check_branch
        %292 = sbr.rel (%p290) target = $region48
      $region47: #{tpu_custom_call.1} parent=5 // pred_region
        // Predicated region
        $region49: #{tpu_custom_call.1} parent=47 // pred_check
          %p293 = pneg %p40
        $region50: #{tpu_custom_call.1} parent=47 // pred_check_branch
          %295 = sbr.rel (%p293) target = $region52
        $region51: #{tpu_custom_call.1} parent=47 // pred_region
          %s296 = smul.u32 32, %s20
          %s297 = ssub.s32 40, %s296
          %p298 = scmp.lt.s32.totalorder %s297, 32
          %s299 = scalar_select %p298, %s297, 32
          %s300 = smul.u32 64, %s299
          %p301 = scmp.lt.s32.totalorder %s296, 39
          %s302 = scalar_select %p301, %s296, 39
          %s303 = smul.addr %s302, 4
          %s304 = scalar_lea.vmem %s0, %s303
          %s305 = smul.u32 32, %s20
          %s306 = ssub.s32 40, %s305
          %p307 = scmp.lt.s32.totalorder %s306, 32
          %s308 = scalar_select %p307, %s306, 32
          %s309 = smul.u32 64, %s308
        $region52: #{tpu_custom_call.1} parent=47 // pred_fallthru
          _
      $region48: #{tpu_custom_call.1} parent=5 // pred_fallthru
        _
      %p310 = scmp.le.s32.totalorder 1, %s20
      %p311 = scmp.lt.s32.totalorder %s20, 3
      %p312 = pnand %p310, %p311
      %p313 = pneg %p312
      // Predicated region
      $region53: #{tpu_custom_call.1} parent=5 // pred_check
        _
      $region54: #{tpu_custom_call.1} parent=5 // pred_check_branch
        %315 = sbr.rel (%p312) target = $region56
      $region55: #{tpu_custom_call.1} parent=5 // pred_region
        %s316 = ssub.s32 %s20, 1
        // Predicated region
        $region57: #{tpu_custom_call.1} parent=55 // pred_check
          %p317 = pneg %p109
        $region58: #{tpu_custom_call.1} parent=55 // pred_check_branch
          %319 = sbr.rel (%p317) target = $region60
        $region59: #{tpu_custom_call.1} parent=55 // pred_region
          %320 = dma.done [#allocation4], 8192
        $region60: #{tpu_custom_call.1} parent=55 // pred_fallthru
          _
        %s321 = smul.u32 32, %s25
        %s322 = ssub.s32 40, %s321
        %p323 = scmp.lt.s32.totalorder %s322, 32
        %s324 = scalar_select %p323, %s322, 32
        %s325 = smul.u32 64, %s324
        %p326 = scmp.lt.s32.totalorder %s321, 39
        %s327 = scalar_select %p326, %s321, 39
        %s328 = smul.addr %s327, 4
        %s329 = scalar_lea.vmem %s0, %s328
        %p330 = pneg %p46
        %p331 = pneg %p43
        %p332 = pneg %p67
        %p333 = pneg %p64
        %p334 = pneg %p88
        %p335 = pneg %p85
        %p336 = pneg %p109
        %p337 = pneg %p106
        %p338 = pneg %p130
        %p339 = pneg %p127
        %p340 = pneg %p151
        %p341 = pneg %p148
        %p342 = pneg %p172
        %p343 = pneg %p169
        %p344 = pneg %p193
        %p345 = pneg %p190
        %p346 = pneg %p214
        %p347 = pneg %p211
        %p348 = pneg %p240
        %p349 = pneg %p237
        %s350 = sand.u32 %s227, 1
        %s351 = scalar_lea.sflag [#allocation5], %s350
        %s352 = sand.u32 %s227, 1
        %s353 = smul.addr %s352, 2
        %s354 = scalar_lea.vmem [#allocation6], %s353
        %s355 = smul.u32 32, %s25
        %s356 = ssub.s32 40, %s355
        %p357 = scmp.lt.s32.totalorder %s356, 32
        %s358 = scalar_select %p357, %s356, 32
        %s359 = smul.u32 64, %s358
        %p360 = scmp.lt.s32.totalorder %s355, 39
        %s361 = scalar_select %p360, %s355, 39
        %s362 = smul.addr %s361, 4
        %s363 = scalar_lea.vmem %s0, %s362
        %s364 = smul.u32 32, %s25
        %s365 = ssub.s32 40, %s364
        %p366 = scmp.lt.s32.totalorder %s365, 32
        %s367 = scalar_select %p366, %s365, 32
        %s368 = smul.u32 64, %s367
        %s369 = smul.u32 2, %s25
        %s370 = ssub.s32 3, %s369
        %p371 = scmp.lt.s32.totalorder %s370, 2
        %s372 = scalar_select %p371, %s370, 2
        %s373 = smul.u32 16, %s372
        %v376 = vld [vmem:[%s363] sm:$0xf]
        %v377 = vld [vmem:[%s363 + $0x4] sm:$0xf]
        %v378 = vld [vmem:[%s363 + $0x8] sm:$0xf]
        %v379 = vld [vmem:[%s363 + $0xc] sm:$0xf]
        %v380 = vld [vmem:[%s363 + $0x10] sm:$0xf]
        %v381 = vld [vmem:[%s363 + $0x14] sm:$0xf]
        %v382 = vld [vmem:[%s363 + $0x18] sm:$0xf]
        %v383 = vld [vmem:[%s363 + $0x1c] sm:$0xf]
        %v384 = vld [vmem:[%s363 + $0x20] sm:$0xf]
        %v385 = vld [vmem:[%s363 + $0x24] sm:$0xf]
        %v386 = vld [vmem:[%s363 + $0x28] sm:$0xf]
        %v387 = vld [vmem:[%s363 + $0x2c] sm:$0xf]
        %v388 = vld [vmem:[%s363 + $0x30] sm:$0xf]
        %v389 = vld [vmem:[%s363 + $0x34] sm:$0xf]
        %v390 = vld [vmem:[%s363 + $0x38] sm:$0xf]
        %v391 = vld [vmem:[%s363 + $0x3c] sm:$0xf]
        %v392 = vld [vmem:[%s363 + $0x40] sm:$0xf]
        %v393 = vld [vmem:[%s363 + $0x44] sm:$0xf]
        %v394 = vld [vmem:[%s363 + $0x48] sm:$0xf]
        %v395 = vld [vmem:[%s363 + $0x4c] sm:$0xf]
        %v396 = vld [vmem:[%s363 + $0x50] sm:$0xf]
        %v397 = vld [vmem:[%s363 + $0x54] sm:$0xf]
        %v398 = vld [vmem:[%s363 + $0x58] sm:$0xf]
        %v399 = vld [vmem:[%s363 + $0x5c] sm:$0xf]
        %v400 = vld [vmem:[%s363 + $0x60] sm:$0xf]
        %v401 = vld [vmem:[%s363 + $0x64] sm:$0xf]
        %v402 = vld [vmem:[%s363 + $0x68] sm:$0xf]
        %v403 = vld [vmem:[%s363 + $0x6c] sm:$0xf]
        %v404 = vld [vmem:[%s363 + $0x70] sm:$0xf]
        %v405 = vld [vmem:[%s363 + $0x74] sm:$0xf]
        %v406 = vld [vmem:[%s363 + $0x78] sm:$0xf]
        %v407 = vld [vmem:[%s363 + $0x7c] sm:$0xf]
        %v408 = vld [vmem:[%s1] sm:$0xff]
        %v409 = vld [vmem:[%s1 + $0x8] sm:$0xff]
        %v410 = vld [vmem:[%s1 + $0x10] sm:$0xff]
        %v411 = vld [vmem:[%s1 + $0x18] sm:$0xff]
        %v412 = vld [vmem:[%s1 + $0x20] sm:$0xff]
        %v413 = vld [vmem:[%s1 + $0x28] sm:$0xff]
        %v414 = vld [vmem:[%s1 + $0x30] sm:$0xff]
        %v415 = vld [vmem:[%s1 + $0x38] sm:$0xff]
        %v416 = vld [vmem:[%s1 + $0x40] sm:$0xff]
        %v417 = vld [vmem:[%s1 + $0x48] sm:$0xff]
        %v418 = vld [vmem:[%s1 + $0x50] sm:$0xff]
        %v419 = vld [vmem:[%s1 + $0x58] sm:$0xff]
        %v420 = vld [vmem:[%s1 + $0x60] sm:$0xff]
        %v421 = vld [vmem:[%s1 + $0x68] sm:$0xff]
        %v422 = vld [vmem:[%s1 + $0x70] sm:$0xff]
        %v423 = vld [vmem:[%s1 + $0x78] sm:$0xff]
        %v456 = vunpack.c.l.b16 %v376
        %v457 = vunpack.c.l.b16 %v377
        %v458 = vunpack.c.l.b16 %v378
        %v459 = vunpack.c.l.b16 %v379
        %v460 = vunpack.c.l.b16 %v380
        %v461 = vunpack.c.l.b16 %v381
        %v462 = vunpack.c.l.b16 %v382
        %v463 = vunpack.c.l.b16 %v383
        %v464 = vunpack.c.l.b16 %v384
        %v465 = vunpack.c.l.b16 %v385
        %v466 = vunpack.c.l.b16 %v386
        %v467 = vunpack.c.l.b16 %v387
        %v468 = vunpack.c.l.b16 %v388
        %v469 = vunpack.c.l.b16 %v389
        %v470 = vunpack.c.l.b16 %v390
        %v471 = vunpack.c.l.b16 %v391
        %v472 = vunpack.c.l.b16 %v392
        %v473 = vunpack.c.l.b16 %v393
        %v474 = vunpack.c.l.b16 %v394
        %v475 = vunpack.c.l.b16 %v395
        %v476 = vunpack.c.l.b16 %v396
        %v477 = vunpack.c.l.b16 %v397
        %v478 = vunpack.c.l.b16 %v398
        %v479 = vunpack.c.l.b16 %v399
        %v480 = vunpack.c.l.b16 %v400
        %v481 = vunpack.c.l.b16 %v401
        %v482 = vunpack.c.l.b16 %v402
        %v483 = vunpack.c.l.b16 %v403
        %v484 = vunpack.c.l.b16 %v404
        %v485 = vunpack.c.l.b16 %v405
        %v486 = vunpack.c.l.b16 %v406
        %v487 = vunpack.c.l.b16 %v407
        %v488 = vpack.c.b16 %v457, %v456
        %v489 = vpack.c.b16 %v459, %v458
        %v490 = vpack.c.b16 %v461, %v460
        %v491 = vpack.c.b16 %v463, %v462
        %v492 = vpack.c.b16 %v465, %v464
        %v493 = vpack.c.b16 %v467, %v466
        %v494 = vpack.c.b16 %v469, %v468
        %v495 = vpack.c.b16 %v471, %v470
        %v496 = vpack.c.b16 %v473, %v472
        %v497 = vpack.c.b16 %v475, %v474
        %v498 = vpack.c.b16 %v477, %v476
        %v499 = vpack.c.b16 %v479, %v478
        %v500 = vpack.c.b16 %v481, %v480
        %v501 = vpack.c.b16 %v483, %v482
        %v502 = vpack.c.b16 %v485, %v484
        %v503 = vpack.c.b16 %v487, %v486
        %v520 = vunpack.c.l.b16 %v408
        %v521 = vunpack.c.h.b16 %v408
        %v522 = vunpack.c.l.b16 %v409
        %v523 = vunpack.c.h.b16 %v409
        %v524 = vunpack.c.l.b16 %v410
        %v525 = vunpack.c.h.b16 %v410
        %v526 = vunpack.c.l.b16 %v411
        %v527 = vunpack.c.h.b16 %v411
        %v528 = vunpack.c.l.b16 %v412
        %v529 = vunpack.c.h.b16 %v412
        %v530 = vunpack.c.l.b16 %v413
        %v531 = vunpack.c.h.b16 %v413
        %v532 = vunpack.c.l.b16 %v414
        %v533 = vunpack.c.h.b16 %v414
        %v534 = vunpack.c.l.b16 %v415
        %v535 = vunpack.c.h.b16 %v415
        %v536 = vunpack.c.l.b16 %v416
        %v537 = vunpack.c.h.b16 %v416
        %v538 = vunpack.c.l.b16 %v417
        %v539 = vunpack.c.h.b16 %v417
        %v540 = vunpack.c.l.b16 %v418
        %v541 = vunpack.c.h.b16 %v418
        %v542 = vunpack.c.l.b16 %v419
        %v543 = vunpack.c.h.b16 %v419
        %v544 = vunpack.c.l.b16 %v420
        %v545 = vunpack.c.h.b16 %v420
        %v546 = vunpack.c.l.b16 %v421
        %v547 = vunpack.c.h.b16 %v421
        %v548 = vunpack.c.l.b16 %v422
        %v549 = vunpack.c.h.b16 %v422
        %v550 = vunpack.c.l.b16 %v423
        %v551 = vunpack.c.h.b16 %v423
        %v552 = vpack.c.b16 %v524, %v520
        %v553 = vpack.c.b16 %v525, %v521
        %v554 = vpack.c.b16 %v526, %v522
        %v555 = vpack.c.b16 %v527, %v523
        %v556 = vpack.c.b16 %v532, %v528
        %v557 = vpack.c.b16 %v533, %v529
        %v558 = vpack.c.b16 %v534, %v530
        %v559 = vpack.c.b16 %v535, %v531
        %v560 = vpack.c.b16 %v540, %v536
        %v561 = vpack.c.b16 %v541, %v537
        %v562 = vpack.c.b16 %v542, %v538
        %v563 = vpack.c.b16 %v543, %v539
        %v564 = vpack.c.b16 %v548, %v544
        %v565 = vpack.c.b16 %v549, %v545
        %v566 = vpack.c.b16 %v550, %v546
        %v567 = vpack.c.b16 %v551, %v547
        %vm584 = vcmask 523264
        %v586 = vsel %vm584, %v488, 0
        %v589 = vsel %vm584, %v489, 0
        %v592 = vsel %vm584, %v490, 0
        %v595 = vsel %vm584, %v491, 0
        %v598 = vsel %vm584, %v492, 0
        %v601 = vsel %vm584, %v493, 0
        %v604 = vsel %vm584, %v494, 0
        %v607 = vsel %vm584, %v495, 0
        %v610 = vsel %vm584, %v496, 0
        %v613 = vsel %vm584, %v497, 0
        %v616 = vsel %vm584, %v498, 0
        %v619 = vsel %vm584, %v499, 0
        %v622 = vsel %vm584, %v500, 0
        %v625 = vsel %vm584, %v501, 0
        %v628 = vsel %vm584, %v502, 0
        %v631 = vsel %vm584, %v503, 0
        %633 = vmatprep.subr.bf16.mxu0 %v553
        %634 = vmatpush1.bf16.msra.mxu0 %v552
        %635 = vmatprep.subr.bf16.mxu0 %v557
        %636 = vmatpush1.bf16.msra.mxu0 %v556
        %637 = vmatprep.subr.bf16.mxu0 %v561
        %638 = vmatpush1.bf16.msra.mxu0 %v560
        %639 = vmatprep.subr.bf16.mxu0 %v565
        %640 = vmatpush1.bf16.msra.mxu0 %v564
        %641 = vmatprep.subr.bf16.mxu0 0
        %642 = vmatpush1.bf16.msra.mxu0 0
        %643 = vmatprep.subr.bf16.mxu0 0
        %644 = vmatpush1.bf16.msra.mxu0 0
        %645 = vmatprep.subr.bf16.mxu0 0
        %646 = vmatpush1.bf16.msra.mxu0 0
        %647 = vmatprep.subr.bf16.mxu0 0
        %648 = vmatpush1.bf16.msra.mxu0 0
        %649 = vmatprep.subr.bf16.mxu0 0
        %650 = vmatpush1.bf16.msra.mxu0 0
        %651 = vmatprep.subr.bf16.mxu0 0
        %652 = vmatpush1.bf16.msra.mxu0 0
        %653 = vmatprep.subr.bf16.mxu0 0
        %654 = vmatpush1.bf16.msra.mxu0 0
        %655 = vmatprep.subr.bf16.mxu0 0
        %656 = vmatpush1.bf16.msra.mxu0 0
        %657 = vmatprep.subr.bf16.mxu0 0
        %658 = vmatpush1.bf16.msra.mxu0 0
        %659 = vmatprep.subr.bf16.mxu0 0
        %660 = vmatpush1.bf16.msra.mxu0 0
        %661 = vmatprep.subr.bf16.mxu0 0
        %662 = vmatpush1.bf16.msra.mxu0 0
        %663 = vmatprep.subr.bf16.mxu0 0
        %664 = vmatpush1.bf16.msra.mxu0 0
        %665 = vmatprep.mubr.bf16.mxu0 0
        %666 = vmatmul.mubr.bf16.gmra.mrb[0].mxu0 %v586
        %v667 = vpop.f32.mrb[0].mxu0
        %v668 = vadd.f32 0.0, %v667
        %v669 = vpop.f32.mrb[0].mxu0
        %v670 = vadd.f32 0.0, %v669
        %v671 = vpop.f32.mrb[0].mxu0
        %v672 = vadd.f32 0.0, %v671
        %v673 = vpop.f32.mrb[0].mxu0
        %v674 = vadd.f32 0.0, %v673
        %675 = vmatprep.mubr.bf16.mxu0 0
        %676 = vmatmul.mubr.bf16.gmra.mrb[0].mxu0 %v589
        %v677 = vpop.f32.mrb[0].mxu0
        %v678 = vadd.f32 0.0, %v677
        %v679 = vpop.f32.mrb[0].mxu0
        %v680 = vadd.f32 0.0, %v679
        %v681 = vpop.f32.mrb[0].mxu0
        %v682 = vadd.f32 0.0, %v681
        %v683 = vpop.f32.mrb[0].mxu0
        %v684 = vadd.f32 0.0, %v683
        %685 = vmatprep.mubr.bf16.mxu0 0
        %686 = vmatmul.mubr.bf16.gmra.mrb[0].mxu0 %v592
        %v687 = vpop.f32.mrb[0].mxu0
        %v688 = vadd.f32 0.0, %v687
        %v689 = vpop.f32.mrb[0].mxu0
        %v690 = vadd.f32 0.0, %v689
        %v691 = vpop.f32.mrb[0].mxu0
        %v692 = vadd.f32 0.0, %v691
        %v693 = vpop.f32.mrb[0].mxu0
        %v694 = vadd.f32 0.0, %v693
        %695 = vmatprep.mubr.bf16.mxu0 0
        %696 = vmatmul.mubr.bf16.gmra.mrb[0].mxu0 %v595
        %v697 = vpop.f32.mrb[0].mxu0
        %v698 = vadd.f32 0.0, %v697
        %v699 = vpop.f32.mrb[0].mxu0
        %v700 = vadd.f32 0.0, %v699
        %v701 = vpop.f32.mrb[0].mxu0
        %v702 = vadd.f32 0.0, %v701
        %v703 = vpop.f32.mrb[0].mxu0
        %v704 = vadd.f32 0.0, %v703
        %705 = vmatprep.mubr.bf16.mxu0 0
        %706 = vmatmul.mubr.bf16.gmra.mrb[0].mxu0 %v598
        %v707 = vpop.f32.mrb[0].mxu0
        %v708 = vadd.f32 0.0, %v707
        %v709 = vpop.f32.mrb[0].mxu0
        %v710 = vadd.f32 0.0, %v709
        %v711 = vpop.f32.mrb[0].mxu0
        %v712 = vadd.f32 0.0, %v711
        %v713 = vpop.f32.mrb[0].mxu0
        %v714 = vadd.f32 0.0, %v713
        %715 = vmatprep.mubr.bf16.mxu0 0
        %716 = vmatmul.mubr.bf16.gmra.mrb[0].mxu0 %v601
        %v717 = vpop.f32.mrb[0].mxu0
        %v718 = vadd.f32 0.0, %v717
        %v719 = vpop.f32.mrb[0].mxu0
        %v720 = vadd.f32 0.0, %v719
        %v721 = vpop.f32.mrb[0].mxu0
        %v722 = vadd.f32 0.0, %v721
        %v723 = vpop.f32.mrb[0].mxu0
        %v724 = vadd.f32 0.0, %v723
        %725 = vmatprep.mubr.bf16.mxu0 0
        %726 = vmatmul.mubr.bf16.gmra.mrb[0].mxu0 %v604
        %v727 = vpop.f32.mrb[0].mxu0
        %v728 = vadd.f32 0.0, %v727
        %v729 = vpop.f32.mrb[0].mxu0
        %v730 = vadd.f32 0.0, %v729
        %v731 = vpop.f32.mrb[0].mxu0
        %v732 = vadd.f32 0.0, %v731
        %v733 = vpop.f32.mrb[0].mxu0
        %v734 = vadd.f32 0.0, %v733
        %735 = vmatprep.mubr.bf16.mxu0 0
        %736 = vmatmul.mubr.bf16.gmra.mrb[0].mxu0 %v607
        %v737 = vpop.f32.mrb[0].mxu0
        %v738 = vadd.f32 0.0, %v737
        %v739 = vpop.f32.mrb[0].mxu0
        %v740 = vadd.f32 0.0, %v739
        %v741 = vpop.f32.mrb[0].mxu0
        %v742 = vadd.f32 0.0, %v741
        %v743 = vpop.f32.mrb[0].mxu0
        %v744 = vadd.f32 0.0, %v743
        %745 = vmatprep.mubr.bf16.mxu0 0
        %746 = vmatmul.mubr.bf16.gmra.mrb[0].mxu0 %v610
        %v747 = vpop.f32.mrb[0].mxu0
        %v748 = vadd.f32 0.0, %v747
        %v749 = vpop.f32.mrb[0].mxu0
        %v750 = vadd.f32 0.0, %v749
        %v751 = vpop.f32.mrb[0].mxu0
        %v752 = vadd.f32 0.0, %v751
        %v753 = vpop.f32.mrb[0].mxu0
        %v754 = vadd.f32 0.0, %v753
        %755 = vmatprep.mubr.bf16.mxu0 0
        %756 = vmatmul.mubr.bf16.gmra.mrb[0].mxu0 %v613
        %v757 = vpop.f32.mrb[0].mxu0
        %v758 = vadd.f32 0.0, %v757
        %v759 = vpop.f32.mrb[0].mxu0
        %v760 = vadd.f32 0.0, %v759
        %v761 = vpop.f32.mrb[0].mxu0
        %v762 = vadd.f32 0.0, %v761
        %v763 = vpop.f32.mrb[0].mxu0
        %v764 = vadd.f32 0.0, %v763
        %765 = vmatprep.mubr.bf16.mxu0 0
        %766 = vmatmul.mubr.bf16.gmra.mrb[0].mxu0 %v616
        %v767 = vpop.f32.mrb[0].mxu0
        %v768 = vadd.f32 0.0, %v767
        %v769 = vpop.f32.mrb[0].mxu0
        %v770 = vadd.f32 0.0, %v769
        %v771 = vpop.f32.mrb[0].mxu0
        %v772 = vadd.f32 0.0, %v771
        %v773 = vpop.f32.mrb[0].mxu0
        %v774 = vadd.f32 0.0, %v773
        %775 = vmatprep.mubr.bf16.mxu0 0
        %776 = vmatmul.mubr.bf16.gmra.mrb[0].mxu0 %v619
        %v777 = vpop.f32.mrb[0].mxu0
        %v778 = vadd.f32 0.0, %v777
        %v779 = vpop.f32.mrb[0].mxu0
        %v780 = vadd.f32 0.0, %v779
        %v781 = vpop.f32.mrb[0].mxu0
        %v782 = vadd.f32 0.0, %v781
        %v783 = vpop.f32.mrb[0].mxu0
        %v784 = vadd.f32 0.0, %v783
        %785 = vmatprep.mubr.bf16.mxu0 0
        %786 = vmatmul.mubr.bf16.gmra.mrb[0].mxu0 %v622
        %v787 = vpop.f32.mrb[0].mxu0
        %v788 = vadd.f32 0.0, %v787
        %v789 = vpop.f32.mrb[0].mxu0
        %v790 = vadd.f32 0.0, %v789
        %v791 = vpop.f32.mrb[0].mxu0
        %v792 = vadd.f32 0.0, %v791
        %v793 = vpop.f32.mrb[0].mxu0
        %v794 = vadd.f32 0.0, %v793
        %795 = vmatprep.mubr.bf16.mxu0 0
        %796 = vmatmul.mubr.bf16.gmra.mrb[0].mxu0 %v625
        %v797 = vpop.f32.mrb[0].mxu0
        %v798 = vadd.f32 0.0, %v797
        %v799 = vpop.f32.mrb[0].mxu0
        %v800 = vadd.f32 0.0, %v799
        %v801 = vpop.f32.mrb[0].mxu0
        %v802 = vadd.f32 0.0, %v801
        %v803 = vpop.f32.mrb[0].mxu0
        %v804 = vadd.f32 0.0, %v803
        %805 = vmatprep.mubr.bf16.mxu0 0
        %806 = vmatmul.mubr.bf16.gmra.mrb[0].mxu0 %v628
        %v807 = vpop.f32.mrb[0].mxu0
        %v808 = vadd.f32 0.0, %v807
        %v809 = vpop.f32.mrb[0].mxu0
        %v810 = vadd.f32 0.0, %v809
        %v811 = vpop.f32.mrb[0].mxu0
        %v812 = vadd.f32 0.0, %v811
        %v813 = vpop.f32.mrb[0].mxu0
        %v814 = vadd.f32 0.0, %v813
        %815 = vmatprep.mubr.bf16.mxu0 0
        %816 = vmatmul.mubr.bf16.gmra.mrb[0].mxu0 %v631
        %v817 = vpop.f32.mrb[0].mxu0
        %v818 = vadd.f32 0.0, %v817
        %v819 = vpop.f32.mrb[0].mxu0
        %v820 = vadd.f32 0.0, %v819
        %v821 = vpop.f32.mrb[0].mxu0
        %v822 = vadd.f32 0.0, %v821
        %v823 = vpop.f32.mrb[0].mxu0
        %v824 = vadd.f32 0.0, %v823
        %825 = vdwg.mxu0
        %826 = vmatprep.subr.bf16.mxu0 %v555
        %827 = vmatpush1.bf16.msra.mxu0 %v554
        %828 = vmatprep.subr.bf16.mxu0 %v559
        %829 = vmatpush1.bf16.msra.mxu0 %v558
        %830 = vmatprep.subr.bf16.mxu0 %v563
        %831 = vmatpush1.bf16.msra.mxu0 %v562
        %832 = vmatprep.subr.bf16.mxu0 %v567
        %833 = vmatpush1.bf16.msra.mxu0 %v566
        %834 = vmatprep.subr.bf16.mxu0 0
        %835 = vmatpush1.bf16.msra.mxu0 0
        %836 = vmatprep.subr.bf16.mxu0 0
        %837 = vmatpush1.bf16.msra.mxu0 0
        %838 = vmatprep.subr.bf16.mxu0 0
        %839 = vmatpush1.bf16.msra.mxu0 0
        %840 = vmatprep.subr.bf16.mxu0 0
        %841 = vmatpush1.bf16.msra.mxu0 0
        %842 = vmatprep.subr.bf16.mxu0 0
        %843 = vmatpush1.bf16.msra.mxu0 0
        %844 = vmatprep.subr.bf16.mxu0 0
        %845 = vmatpush1.bf16.msra.mxu0 0
        %846 = vmatprep.subr.bf16.mxu0 0
        %847 = vmatpush1.bf16.msra.mxu0 0
        %848 = vmatprep.subr.bf16.mxu0 0
        %849 = vmatpush1.bf16.msra.mxu0 0
        %850 = vmatprep.subr.bf16.mxu0 0
        %851 = vmatpush1.bf16.msra.mxu0 0
        %852 = vmatprep.subr.bf16.mxu0 0
        %853 = vmatpush1.bf16.msra.mxu0 0
        %854 = vmatprep.subr.bf16.mxu0 0
        %855 = vmatpush1.bf16.msra.mxu0 0
        %856 = vmatprep.subr.bf16.mxu0 0
        %857 = vmatpush1.bf16.msra.mxu0 0
        %858 = vmatprep.mubr.bf16.mxu0 0
        %859 = vmatmul.mubr.bf16.gmra.mrb[0].mxu0 %v586
        %v860 = vpop.f32.mrb[0].mxu0
        %v861 = vadd.f32 0.0, %v860
        %v862 = vpop.f32.mrb[0].mxu0
        %v863 = vadd.f32 0.0, %v862
        %v864 = vpop.f32.mrb[0].mxu0
        %v865 = vadd.f32 0.0, %v864
        %v866 = vpop.f32.mrb[0].mxu0
        %v867 = vadd.f32 0.0, %v866
        %868 = vmatprep.mubr.bf16.mxu0 0
        %869 = vmatmul.mubr.bf16.gmra.mrb[0].mxu0 %v589
        %v870 = vpop.f32.mrb[0].mxu0
        %v871 = vadd.f32 0.0, %v870
        %v872 = vpop.f32.mrb[0].mxu0
        %v873 = vadd.f32 0.0, %v872
        %v874 = vpop.f32.mrb[0].mxu0
        %v875 = vadd.f32 0.0, %v874
        %v876 = vpop.f32.mrb[0].mxu0
        %v877 = vadd.f32 0.0, %v876
        %878 = vmatprep.mubr.bf16.mxu0 0
        %879 = vmatmul.mubr.bf16.gmra.mrb[0].mxu0 %v592
        %v880 = vpop.f32.mrb[0].mxu0
        %v881 = vadd.f32 0.0, %v880
        %v882 = vpop.f32.mrb[0].mxu0
        %v883 = vadd.f32 0.0, %v882
        %v884 = vpop.f32.mrb[0].mxu0
        %v885 = vadd.f32 0.0, %v884
        %v886 = vpop.f32.mrb[0].mxu0
        %v887 = vadd.f32 0.0, %v886
        %888 = vmatprep.mubr.bf16.mxu0 0
        %889 = vmatmul.mubr.bf16.gmra.mrb[0].mxu0 %v595
        %v890 = vpop.f32.mrb[0].mxu0
        %v891 = vadd.f32 0.0, %v890
        %v892 = vpop.f32.mrb[0].mxu0
        %v893 = vadd.f32 0.0, %v892
        %v894 = vpop.f32.mrb[0].mxu0
        %v895 = vadd.f32 0.0, %v894
        %v896 = vpop.f32.mrb[0].mxu0
        %v897 = vadd.f32 0.0, %v896
        %898 = vmatprep.mubr.bf16.mxu0 0
        %899 = vmatmul.mubr.bf16.gmra.mrb[0].mxu0 %v598
        %v900 = vpop.f32.mrb[0].mxu0
        %v901 = vadd.f32 0.0, %v900
        %v902 = vpop.f32.mrb[0].mxu0
        %v903 = vadd.f32 0.0, %v902
        %v904 = vpop.f32.mrb[0].mxu0
        %v905 = vadd.f32 0.0, %v904
        %v906 = vpop.f32.mrb[0].mxu0
        %v907 = vadd.f32 0.0, %v906
        %908 = vmatprep.mubr.bf16.mxu0 0
        %909 = vmatmul.mubr.bf16.gmra.mrb[0].mxu0 %v601
        %v910 = vpop.f32.mrb[0].mxu0
        %v911 = vadd.f32 0.0, %v910
        %v912 = vpop.f32.mrb[0].mxu0
        %v913 = vadd.f32 0.0, %v912
        %v914 = vpop.f32.mrb[0].mxu0
        %v915 = vadd.f32 0.0, %v914
        %v916 = vpop.f32.mrb[0].mxu0
        %v917 = vadd.f32 0.0, %v916
        %918 = vmatprep.mubr.bf16.mxu0 0
        %919 = vmatmul.mubr.bf16.gmra.mrb[0].mxu0 %v604
        %v920 = vpop.f32.mrb[0].mxu0
        %v921 = vadd.f32 0.0, %v920
        %v922 = vpop.f32.mrb[0].mxu0
        %v923 = vadd.f32 0.0, %v922
        %v924 = vpop.f32.mrb[0].mxu0
        %v925 = vadd.f32 0.0, %v924
        %v926 = vpop.f32.mrb[0].mxu0
        %v927 = vadd.f32 0.0, %v926
        %928 = vmatprep.mubr.bf16.mxu0 0
        %929 = vmatmul.mubr.bf16.gmra.mrb[0].mxu0 %v607
        %v930 = vpop.f32.mrb[0].mxu0
        %v931 = vadd.f32 0.0, %v930
        %v932 = vpop.f32.mrb[0].mxu0
        %v933 = vadd.f32 0.0, %v932
        %v934 = vpop.f32.mrb[0].mxu0
        %v935 = vadd.f32 0.0, %v934
        %v936 = vpop.f32.mrb[0].mxu0
        %v937 = vadd.f32 0.0, %v936
        %938 = vmatprep.mubr.bf16.mxu0 0
        %939 = vmatmul.mubr.bf16.gmra.mrb[0].mxu0 %v610
        %v940 = vpop.f32.mrb[0].mxu0
        %v941 = vadd.f32 0.0, %v940
        %v942 = vpop.f32.mrb[0].mxu0
        %v943 = vadd.f32 0.0, %v942
        %v944 = vpop.f32.mrb[0].mxu0
        %v945 = vadd.f32 0.0, %v944
        %v946 = vpop.f32.mrb[0].mxu0
        %v947 = vadd.f32 0.0, %v946
        %948 = vmatprep.mubr.bf16.mxu0 0
        %949 = vmatmul.mubr.bf16.gmra.mrb[0].mxu0 %v613
        %v950 = vpop.f32.mrb[0].mxu0
        %v951 = vadd.f32 0.0, %v950
        %v952 = vpop.f32.mrb[0].mxu0
        %v953 = vadd.f32 0.0, %v952
        %v954 = vpop.f32.mrb[0].mxu0
        %v955 = vadd.f32 0.0, %v954
        %v956 = vpop.f32.mrb[0].mxu0
        %v957 = vadd.f32 0.0, %v956
        %958 = vmatprep.mubr.bf16.mxu0 0
        %959 = vmatmul.mubr.bf16.gmra.mrb[0].mxu0 %v616
        %v960 = vpop.f32.mrb[0].mxu0
        %v961 = vadd.f32 0.0, %v960
        %v962 = vpop.f32.mrb[0].mxu0
        %v963 = vadd.f32 0.0, %v962
        %v964 = vpop.f32.mrb[0].mxu0
        %v965 = vadd.f32 0.0, %v964
        %v966 = vpop.f32.mrb[0].mxu0
        %v967 = vadd.f32 0.0, %v966
        %968 = vmatprep.mubr.bf16.mxu0 0
        %969 = vmatmul.mubr.bf16.gmra.mrb[0].mxu0 %v619
        %v970 = vpop.f32.mrb[0].mxu0
        %v971 = vadd.f32 0.0, %v970
        %v972 = vpop.f32.mrb[0].mxu0
        %v973 = vadd.f32 0.0, %v972
        %v974 = vpop.f32.mrb[0].mxu0
        %v975 = vadd.f32 0.0, %v974
        %v976 = vpop.f32.mrb[0].mxu0
        %v977 = vadd.f32 0.0, %v976
        %978 = vmatprep.mubr.bf16.mxu0 0
        %979 = vmatmul.mubr.bf16.gmra.mrb[0].mxu0 %v622
        %v980 = vpop.f32.mrb[0].mxu0
        %v981 = vadd.f32 0.0, %v980
        %v982 = vpop.f32.mrb[0].mxu0
        %v983 = vadd.f32 0.0, %v982
        %v984 = vpop.f32.mrb[0].mxu0
        %v985 = vadd.f32 0.0, %v984
        %v986 = vpop.f32.mrb[0].mxu0
        %v987 = vadd.f32 0.0, %v986
        %988 = vmatprep.mubr.bf16.mxu0 0
        %989 = vmatmul.mubr.bf16.gmra.mrb[0].mxu0 %v625
        %v990 = vpop.f32.mrb[0].mxu0
        %v991 = vadd.f32 0.0, %v990
        %v992 = vpop.f32.mrb[0].mxu0
        %v993 = vadd.f32 0.0, %v992
        %v994 = vpop.f32.mrb[0].mxu0
        %v995 = vadd.f32 0.0, %v994
        %v996 = vpop.f32.mrb[0].mxu0
        %v997 = vadd.f32 0.0, %v996
        %998 = vmatprep.mubr.bf16.mxu0 0
        %999 = vmatmul.mubr.bf16.gmra.mrb[0].mxu0 %v628
        %v1000 = vpop.f32.mrb[0].mxu0
        %v1001 = vadd.f32 0.0, %v1000
        %v1002 = vpop.f32.mrb[0].mxu0
        %v1003 = vadd.f32 0.0, %v1002
        %v1004 = vpop.f32.mrb[0].mxu0
        %v1005 = vadd.f32 0.0, %v1004
        %v1006 = vpop.f32.mrb[0].mxu0
        %v1007 = vadd.f32 0.0, %v1006
        %1008 = vmatprep.mubr.bf16.mxu0 0
        %1009 = vmatmul.mubr.bf16.gmra.mrb[0].mxu0 %v631
        %v1010 = vpop.f32.mrb[0].mxu0
        %v1011 = vadd.f32 0.0, %v1010
        %v1012 = vpop.f32.mrb[0].mxu0
        %v1013 = vadd.f32 0.0, %v1012
        %v1014 = vpop.f32.mrb[0].mxu0
        %v1015 = vadd.f32 0.0, %v1014
        %v1016 = vpop.f32.mrb[0].mxu0
        %v1017 = vadd.f32 0.0, %v1016
        %1018 = vdwg.mxu0
        %v1019 = vpack.c.bf16 %v672, %v668
        %v1020 = vpack.c.bf16 %v674, %v670
        %v1021 = vpack.c.bf16 %v865, %v861
        %v1022 = vpack.c.bf16 %v867, %v863
        %v1023 = vpack.c.bf16 %v682, %v678
        %v1024 = vpack.c.bf16 %v684, %v680
        %v1025 = vpack.c.bf16 %v875, %v871
        %v1026 = vpack.c.bf16 %v877, %v873
        %v1027 = vpack.c.bf16 %v692, %v688
        %v1028 = vpack.c.bf16 %v694, %v690
        %v1029 = vpack.c.bf16 %v885, %v881
        %v1030 = vpack.c.bf16 %v887, %v883
        %v1031 = vpack.c.bf16 %v702, %v698
        %v1032 = vpack.c.bf16 %v704, %v700
        %v1033 = vpack.c.bf16 %v895, %v891
        %v1034 = vpack.c.bf16 %v897, %v893
        %v1035 = vpack.c.bf16 %v712, %v708
        %v1036 = vpack.c.bf16 %v714, %v710
        %v1037 = vpack.c.bf16 %v905, %v901
        %v1038 = vpack.c.bf16 %v907, %v903
        %v1039 = vpack.c.bf16 %v722, %v718
        %v1040 = vpack.c.bf16 %v724, %v720
        %v1041 = vpack.c.bf16 %v915, %v911
        %v1042 = vpack.c.bf16 %v917, %v913
        %v1043 = vpack.c.bf16 %v732, %v728
        %v1044 = vpack.c.bf16 %v734, %v730
        %v1045 = vpack.c.bf16 %v925, %v921
        %v1046 = vpack.c.bf16 %v927, %v923
        %v1047 = vpack.c.bf16 %v742, %v738
        %v1048 = vpack.c.bf16 %v744, %v740
        %v1049 = vpack.c.bf16 %v935, %v931
        %v1050 = vpack.c.bf16 %v937, %v933
        %v1051 = vpack.c.bf16 %v752, %v748
        %v1052 = vpack.c.bf16 %v754, %v750
        %v1053 = vpack.c.bf16 %v945, %v941
        %v1054 = vpack.c.bf16 %v947, %v943
        %v1055 = vpack.c.bf16 %v762, %v758
        %v1056 = vpack.c.bf16 %v764, %v760
        %v1057 = vpack.c.bf16 %v955, %v951
        %v1058 = vpack.c.bf16 %v957, %v953
        %v1059 = vpack.c.bf16 %v772, %v768
        %v1060 = vpack.c.bf16 %v774, %v770
        %v1061 = vpack.c.bf16 %v965, %v961
        %v1062 = vpack.c.bf16 %v967, %v963
        %v1063 = vpack.c.bf16 %v782, %v778
        %v1064 = vpack.c.bf16 %v784, %v780
        %v1065 = vpack.c.bf16 %v975, %v971
        %v1066 = vpack.c.bf16 %v977, %v973
        %v1067 = vpack.c.bf16 %v792, %v788
        %v1068 = vpack.c.bf16 %v794, %v790
        %v1069 = vpack.c.bf16 %v985, %v981
        %v1070 = vpack.c.bf16 %v987, %v983
        %v1071 = vpack.c.bf16 %v802, %v798
        %v1072 = vpack.c.bf16 %v804, %v800
        %v1073 = vpack.c.bf16 %v995, %v991
        %v1074 = vpack.c.bf16 %v997, %v993
        %v1075 = vpack.c.bf16 %v812, %v808
        %v1076 = vpack.c.bf16 %v814, %v810
        %v1077 = vpack.c.bf16 %v1005, %v1001
        %v1078 = vpack.c.bf16 %v1007, %v1003
        %v1079 = vpack.c.bf16 %v822, %v818
        %v1080 = vpack.c.bf16 %v824, %v820
        %v1081 = vpack.c.bf16 %v1015, %v1011
        %v1082 = vpack.c.bf16 %v1017, %v1013
        %v1083 = vld [vmem:[%s2] sm:$0xf]
        %v1086 = vunpack.c.l.s4 1966171168
        %v1087 = vunpack.c.0.s8 %v1086
        %v1088 = vlaneseq
        %v1089 = vshrl.u32 %v1088, 7
        %v1090 = vsub.s32 %v1087, %v1089
        %v1091 = vrot.slane %v1083, %v1090
        %v1092 = vcombine.high %v1091, %v1091
        %v1094 = vunpack.c.l.s4 1966171168
        %v1095 = vunpack.c.0.s8 %v1094
        %v1096 = vlaneseq
        %v1097 = vshrl.u32 %v1096, 7
        %v1098 = vsub.s32 %v1095, %v1097
        %v1099 = vrot.slane %v1091, %v1098
        %v1101 = vunpack.c.l.s4 1966171168
        %v1102 = vunpack.c.0.s8 %v1101
        %v1103 = vlaneseq
        %v1104 = vshrl.u32 %v1103, 7
        %v1105 = vsub.s32 %v1102, %v1104
        %v1106 = vrot.slane %v1092, %v1105
        %v1107 = vcombine.high %v1099, %v1099
        %v1108 = vcombine.high %v1106, %v1106
        %v1110 = vpack.i.b16 %v1099, %v1099
        %v1112 = vlaneseq
        %v1113 = vshrl.u32 %v1112, 7
        %v1114 = vsub.s32 0, %v1113
        %v1115 = vrot.slane %v1110, %v1114
        %v1117 = vpack.i.b16 %v1106, %v1106
        %v1119 = vlaneseq
        %v1120 = vshrl.u32 %v1119, 7
        %v1121 = vsub.s32 0, %v1120
        %v1122 = vrot.slane %v1117, %v1121
        %v1124 = vpack.i.b16 %v1107, %v1107
        %v1126 = vlaneseq
        %v1127 = vshrl.u32 %v1126, 7
        %v1128 = vsub.s32 0, %v1127
        %v1129 = vrot.slane %v1124, %v1128
        %v1131 = vpack.i.b16 %v1108, %v1108
        %v1133 = vlaneseq
        %v1134 = vshrl.u32 %v1133, 7
        %v1135 = vsub.s32 0, %v1134
        %v1136 = vrot.slane %v1131, %v1135
        %v1137 = vadd.bf16 %v1019, %v1115
        %v1138 = vadd.bf16 %v1020, %v1122
        %v1139 = vadd.bf16 %v1021, %v1129
        %v1140 = vadd.bf16 %v1022, %v1136
        %v1141 = vadd.bf16 %v1023, %v1115
        %v1142 = vadd.bf16 %v1024, %v1122
        %v1143 = vadd.bf16 %v1025, %v1129
        %v1144 = vadd.bf16 %v1026, %v1136
        %v1145 = vadd.bf16 %v1027, %v1115
        %v1146 = vadd.bf16 %v1028, %v1122
        %v1147 = vadd.bf16 %v1029, %v1129
        %v1148 = vadd.bf16 %v1030, %v1136
        %v1149 = vadd.bf16 %v1031, %v1115
        %v1150 = vadd.bf16 %v1032, %v1122
        %v1151 = vadd.bf16 %v1033, %v1129
        %v1152 = vadd.bf16 %v1034, %v1136
        %v1153 = vadd.bf16 %v1035, %v1115
        %v1154 = vadd.bf16 %v1036, %v1122
        %v1155 = vadd.bf16 %v1037, %v1129
        %v1156 = vadd.bf16 %v1038, %v1136
        %v1157 = vadd.bf16 %v1039, %v1115
        %v1158 = vadd.bf16 %v1040, %v1122
        %v1159 = vadd.bf16 %v1041, %v1129
        %v1160 = vadd.bf16 %v1042, %v1136
        %v1161 = vadd.bf16 %v1043, %v1115
        %v1162 = vadd.bf16 %v1044, %v1122
        %v1163 = vadd.bf16 %v1045, %v1129
        %v1164 = vadd.bf16 %v1046, %v1136
        %v1165 = vadd.bf16 %v1047, %v1115
        %v1166 = vadd.bf16 %v1048, %v1122
        %v1167 = vadd.bf16 %v1049, %v1129
        %v1168 = vadd.bf16 %v1050, %v1136
        %v1169 = vadd.bf16 %v1051, %v1115
        %v1170 = vadd.bf16 %v1052, %v1122
        %v1171 = vadd.bf16 %v1053, %v1129
        %v1172 = vadd.bf16 %v1054, %v1136
        %v1173 = vadd.bf16 %v1055, %v1115
        %v1174 = vadd.bf16 %v1056, %v1122
        %v1175 = vadd.bf16 %v1057, %v1129
        %v1176 = vadd.bf16 %v1058, %v1136
        %v1177 = vadd.bf16 %v1059, %v1115
        %v1178 = vadd.bf16 %v1060, %v1122
        %v1179 = vadd.bf16 %v1061, %v1129
        %v1180 = vadd.bf16 %v1062, %v1136
        %v1181 = vadd.bf16 %v1063, %v1115
        %v1182 = vadd.bf16 %v1064, %v1122
        %v1183 = vadd.bf16 %v1065, %v1129
        %v1184 = vadd.bf16 %v1066, %v1136
        %v1185 = vadd.bf16 %v1067, %v1115
        %v1186 = vadd.bf16 %v1068, %v1122
        %v1187 = vadd.bf16 %v1069, %v1129
        %v1188 = vadd.bf16 %v1070, %v1136
        %v1189 = vadd.bf16 %v1071, %v1115
        %v1190 = vadd.bf16 %v1072, %v1122
        %v1191 = vadd.bf16 %v1073, %v1129
        %v1192 = vadd.bf16 %v1074, %v1136
        %v1193 = vadd.bf16 %v1075, %v1115
        %v1194 = vadd.bf16 %v1076, %v1122
        %v1195 = vadd.bf16 %v1077, %v1129
        %v1196 = vadd.bf16 %v1078, %v1136
        %v1197 = vadd.bf16 %v1079, %v1115
        %v1198 = vadd.bf16 %v1080, %v1122
        %v1199 = vadd.bf16 %v1081, %v1129
        %v1200 = vadd.bf16 %v1082, %v1136
        %v1201 = vmul.bf16 %v1137, 1045249613
        %v1202 = vmul.bf16 %v1138, 1045249613
        %v1203 = vmul.bf16 %v1139, 1045249613
        %v1204 = vmul.bf16 %v1140, 1045249613
        %v1205 = vmul.bf16 %v1141, 1045249613
        %v1206 = vmul.bf16 %v1142, 1045249613
        %v1207 = vmul.bf16 %v1143, 1045249613
        %v1208 = vmul.bf16 %v1144, 1045249613
        %v1209 = vmul.bf16 %v1145, 1045249613
        %v1210 = vmul.bf16 %v1146, 1045249613
        %v1211 = vmul.bf16 %v1147, 1045249613
        %v1212 = vmul.bf16 %v1148, 1045249613
        %v1213 = vmul.bf16 %v1149, 1045249613
        %v1214 = vmul.bf16 %v1150, 1045249613
        %v1215 = vmul.bf16 %v1151, 1045249613
        %v1216 = vmul.bf16 %v1152, 1045249613
        %v1217 = vmul.bf16 %v1153, 1045249613
        %v1218 = vmul.bf16 %v1154, 1045249613
        %v1219 = vmul.bf16 %v1155, 1045249613
        %v1220 = vmul.bf16 %v1156, 1045249613
        %v1221 = vmul.bf16 %v1157, 1045249613
        %v1222 = vmul.bf16 %v1158, 1045249613
        %v1223 = vmul.bf16 %v1159, 1045249613
        %v1224 = vmul.bf16 %v1160, 1045249613
        %v1225 = vmul.bf16 %v1161, 1045249613
        %v1226 = vmul.bf16 %v1162, 1045249613
        %v1227 = vmul.bf16 %v1163, 1045249613
        %v1228 = vmul.bf16 %v1164, 1045249613
        %v1229 = vmul.bf16 %v1165, 1045249613
        %v1230 = vmul.bf16 %v1166, 1045249613
        %v1231 = vmul.bf16 %v1167, 1045249613
        %v1232 = vmul.bf16 %v1168, 1045249613
        %v1233 = vmul.bf16 %v1169, 1045249613
        %v1234 = vmul.bf16 %v1170, 1045249613
        %v1235 = vmul.bf16 %v1171, 1045249613
        %v1236 = vmul.bf16 %v1172, 1045249613
        %v1237 = vmul.bf16 %v1173, 1045249613
        %v1238 = vmul.bf16 %v1174, 1045249613
        %v1239 = vmul.bf16 %v1175, 1045249613
        %v1240 = vmul.bf16 %v1176, 1045249613
        %v1241 = vmul.bf16 %v1177, 1045249613
        %v1242 = vmul.bf16 %v1178, 1045249613
        %v1243 = vmul.bf16 %v1179, 1045249613
        %v1244 = vmul.bf16 %v1180, 1045249613
        %v1245 = vmul.bf16 %v1181, 1045249613
        %v1246 = vmul.bf16 %v1182, 1045249613
        %v1247 = vmul.bf16 %v1183, 1045249613
        %v1248 = vmul.bf16 %v1184, 1045249613
        %v1249 = vmul.bf16 %v1185, 1045249613
        %v1250 = vmul.bf16 %v1186, 1045249613
        %v1251 = vmul.bf16 %v1187, 1045249613
        %v1252 = vmul.bf16 %v1188, 1045249613
        %v1253 = vmul.bf16 %v1189, 1045249613
        %v1254 = vmul.bf16 %v1190, 1045249613
        %v1255 = vmul.bf16 %v1191, 1045249613
        %v1256 = vmul.bf16 %v1192, 1045249613
        %v1257 = vmul.bf16 %v1193, 1045249613
        %v1258 = vmul.bf16 %v1194, 1045249613
        %v1259 = vmul.bf16 %v1195, 1045249613
        %v1260 = vmul.bf16 %v1196, 1045249613
        %v1261 = vmul.bf16 %v1197, 1045249613
        %v1262 = vmul.bf16 %v1198, 1045249613
        %v1263 = vmul.bf16 %v1199, 1045249613
        %v1264 = vmul.bf16 %v1200, 1045249613
        %v1265 = vmax.bf16 %v1137, %v1201
        %v1266 = vmax.bf16 %v1138, %v1202
        %v1267 = vmax.bf16 %v1139, %v1203
        %v1268 = vmax.bf16 %v1140, %v1204
        %v1269 = vmax.bf16 %v1141, %v1205
        %v1270 = vmax.bf16 %v1142, %v1206
        %v1271 = vmax.bf16 %v1143, %v1207
        %v1272 = vmax.bf16 %v1144, %v1208
        %v1273 = vmax.bf16 %v1145, %v1209
        %v1274 = vmax.bf16 %v1146, %v1210
        %v1275 = vmax.bf16 %v1147, %v1211
        %v1276 = vmax.bf16 %v1148, %v1212
        %v1277 = vmax.bf16 %v1149, %v1213
        %v1278 = vmax.bf16 %v1150, %v1214
        %v1279 = vmax.bf16 %v1151, %v1215
        %v1280 = vmax.bf16 %v1152, %v1216
        %v1281 = vmax.bf16 %v1153, %v1217
        %v1282 = vmax.bf16 %v1154, %v1218
        %v1283 = vmax.bf16 %v1155, %v1219
        %v1284 = vmax.bf16 %v1156, %v1220
        %v1285 = vmax.bf16 %v1157, %v1221
        %v1286 = vmax.bf16 %v1158, %v1222
        %v1287 = vmax.bf16 %v1159, %v1223
        %v1288 = vmax.bf16 %v1160, %v1224
        %v1289 = vmax.bf16 %v1161, %v1225
        %v1290 = vmax.bf16 %v1162, %v1226
        %v1291 = vmax.bf16 %v1163, %v1227
        %v1292 = vmax.bf16 %v1164, %v1228
        %v1293 = vmax.bf16 %v1165, %v1229
        %v1294 = vmax.bf16 %v1166, %v1230
        %v1295 = vmax.bf16 %v1167, %v1231
        %v1296 = vmax.bf16 %v1168, %v1232
        %v1297 = vmax.bf16 %v1169, %v1233
        %v1298 = vmax.bf16 %v1170, %v1234
        %v1299 = vmax.bf16 %v1171, %v1235
        %v1300 = vmax.bf16 %v1172, %v1236
        %v1301 = vmax.bf16 %v1173, %v1237
        %v1302 = vmax.bf16 %v1174, %v1238
        %v1303 = vmax.bf16 %v1175, %v1239
        %v1304 = vmax.bf16 %v1176, %v1240
        %v1305 = vmax.bf16 %v1177, %v1241
        %v1306 = vmax.bf16 %v1178, %v1242
        %v1307 = vmax.bf16 %v1179, %v1243
        %v1308 = vmax.bf16 %v1180, %v1244
        %v1309 = vmax.bf16 %v1181, %v1245
        %v1310 = vmax.bf16 %v1182, %v1246
        %v1311 = vmax.bf16 %v1183, %v1247
        %v1312 = vmax.bf16 %v1184, %v1248
        %v1313 = vmax.bf16 %v1185, %v1249
        %v1314 = vmax.bf16 %v1186, %v1250
        %v1315 = vmax.bf16 %v1187, %v1251
        %v1316 = vmax.bf16 %v1188, %v1252
        %v1317 = vmax.bf16 %v1189, %v1253
        %v1318 = vmax.bf16 %v1190, %v1254
        %v1319 = vmax.bf16 %v1191, %v1255
        %v1320 = vmax.bf16 %v1192, %v1256
        %v1321 = vmax.bf16 %v1193, %v1257
        %v1322 = vmax.bf16 %v1194, %v1258
        %v1323 = vmax.bf16 %v1195, %v1259
        %v1324 = vmax.bf16 %v1196, %v1260
        %v1325 = vmax.bf16 %v1197, %v1261
        %v1326 = vmax.bf16 %v1198, %v1262
        %v1327 = vmax.bf16 %v1199, %v1263
        %v1328 = vmax.bf16 %v1200, %v1264
        %v1329 = vld [vmem:[#allocation3] sm:$0xff]
        %v1330 = vld [vmem:[#allocation3 + $0x8] sm:$0xff]
        %v1331 = vld [vmem:[#allocation3 + $0x10] sm:$0xff]
        %v1332 = vld [vmem:[#allocation3 + $0x18] sm:$0xff]
        %v1333 = vld [vmem:[#allocation3 + $0x20] sm:$0xff]
        %v1334 = vld [vmem:[#allocation3 + $0x28] sm:$0xff]
        %v1335 = vld [vmem:[#allocation3 + $0x30] sm:$0xff]
        %v1336 = vld [vmem:[#allocation3 + $0x38] sm:$0xff]
        %v1337 = vld [vmem:[#allocation3 + $0x40] sm:$0xff]
        %v1338 = vld [vmem:[#allocation3 + $0x48] sm:$0xff]
        %v1339 = vld [vmem:[#allocation3 + $0x50] sm:$0xff]
        %v1340 = vld [vmem:[#allocation3 + $0x58] sm:$0xff]
        %v1341 = vld [vmem:[#allocation3 + $0x60] sm:$0xff]
        %v1342 = vld [vmem:[#allocation3 + $0x68] sm:$0xff]
        %v1343 = vld [vmem:[#allocation3 + $0x70] sm:$0xff]
        %v1344 = vld [vmem:[#allocation3 + $0x78] sm:$0xff]
        %v1345 = vld [vmem:[#allocation3 + $0x80] sm:$0xff]
        %v1346 = vld [vmem:[#allocation3 + $0x88] sm:$0xff]
        %v1347 = vld [vmem:[#allocation3 + $0x90] sm:$0xff]
        %v1348 = vld [vmem:[#allocation3 + $0x98] sm:$0xff]
        %v1349 = vld [vmem:[#allocation3 + $0xa0] sm:$0xff]
        %v1350 = vld [vmem:[#allocation3 + $0xa8] sm:$0xff]
        %v1351 = vld [vmem:[#allocation3 + $0xb0] sm:$0xff]
        %v1352 = vld [vmem:[#allocation3 + $0xb8] sm:$0xff]
        %v1353 = vld [vmem:[#allocation3 + $0xc0] sm:$0xff]
        %v1354 = vld [vmem:[#allocation3 + $0xc8] sm:$0xff]
        %v1355 = vld [vmem:[#allocation3 + $0xd0] sm:$0xff]
        %v1356 = vld [vmem:[#allocation3 + $0xd8] sm:$0xff]
        %v1357 = vld [vmem:[#allocation3 + $0xe0] sm:$0xff]
        %v1358 = vld [vmem:[#allocation3 + $0xe8] sm:$0xff]
        %v1359 = vld [vmem:[#allocation3 + $0xf0] sm:$0xff]
        %v1360 = vld [vmem:[#allocation3 + $0xf8] sm:$0xff]
        %v1361 = vld [vmem:[#allocation3 + $0x100] sm:$0xff]
        %v1362 = vld [vmem:[#allocation3 + $0x108] sm:$0xff]
        %v1363 = vld [vmem:[#allocation3 + $0x110] sm:$0xff]
        %v1364 = vld [vmem:[#allocation3 + $0x118] sm:$0xff]
        %v1365 = vld [vmem:[#allocation3 + $0x120] sm:$0xff]
        %v1366 = vld [vmem:[#allocation3 + $0x128] sm:$0xff]
        %v1367 = vld [vmem:[#allocation3 + $0x130] sm:$0xff]
        %v1368 = vld [vmem:[#allocation3 + $0x138] sm:$0xff]
        %v1369 = vld [vmem:[#allocation3 + $0x140] sm:$0xff]
        %v1370 = vld [vmem:[#allocation3 + $0x148] sm:$0xff]
        %v1371 = vld [vmem:[#allocation3 + $0x150] sm:$0xff]
        %v1372 = vld [vmem:[#allocation3 + $0x158] sm:$0xff]
        %v1373 = vld [vmem:[#allocation3 + $0x160] sm:$0xff]
        %v1374 = vld [vmem:[#allocation3 + $0x168] sm:$0xff]
        %v1375 = vld [vmem:[#allocation3 + $0x170] sm:$0xff]
        %v1376 = vld [vmem:[#allocation3 + $0x178] sm:$0xff]
        %v1377 = vld [vmem:[#allocation3 + $0x180] sm:$0xff]
        %v1378 = vld [vmem:[#allocation3 + $0x188] sm:$0xff]
        %v1379 = vld [vmem:[#allocation3 + $0x190] sm:$0xff]
        %v1380 = vld [vmem:[#allocation3 + $0x198] sm:$0xff]
        %v1381 = vld [vmem:[#allocation3 + $0x1a0] sm:$0xff]
        %v1382 = vld [vmem:[#allocation3 + $0x1a8] sm:$0xff]
        %v1383 = vld [vmem:[#allocation3 + $0x1b0] sm:$0xff]
        %v1384 = vld [vmem:[#allocation3 + $0x1b8] sm:$0xff]
        %v1385 = vld [vmem:[#allocation3 + $0x1c0] sm:$0xff]
        %v1386 = vld [vmem:[#allocation3 + $0x1c8] sm:$0xff]
        %v1387 = vld [vmem:[#allocation3 + $0x1d0] sm:$0xff]
        %v1388 = vld [vmem:[#allocation3 + $0x1d8] sm:$0xff]
        %v1389 = vld [vmem:[#allocation3 + $0x1e0] sm:$0xff]
        %v1390 = vld [vmem:[#allocation3 + $0x1e8] sm:$0xff]
        %v1391 = vld [vmem:[#allocation3 + $0x1f0] sm:$0xff]
        %v1392 = vld [vmem:[#allocation3 + $0x1f8] sm:$0xff]
        %v1457 = vunpack.c.l.b16 %v1329
        %v1458 = vunpack.c.h.b16 %v1329
        %v1459 = vunpack.c.l.b16 %v1330
        %v1460 = vunpack.c.h.b16 %v1330
        %v1461 = vunpack.c.l.b16 %v1331
        %v1462 = vunpack.c.h.b16 %v1331
        %v1463 = vunpack.c.l.b16 %v1332
        %v1464 = vunpack.c.h.b16 %v1332
        %v1465 = vunpack.c.l.b16 %v1333
        %v1466 = vunpack.c.h.b16 %v1333
        %v1467 = vunpack.c.l.b16 %v1334
        %v1468 = vunpack.c.h.b16 %v1334
        %v1469 = vunpack.c.l.b16 %v1335
        %v1470 = vunpack.c.h.b16 %v1335
        %v1471 = vunpack.c.l.b16 %v1336
        %v1472 = vunpack.c.h.b16 %v1336
        %v1473 = vunpack.c.l.b16 %v1337
        %v1474 = vunpack.c.h.b16 %v1337
        %v1475 = vunpack.c.l.b16 %v1338
        %v1476 = vunpack.c.h.b16 %v1338
        %v1477 = vunpack.c.l.b16 %v1339
        %v1478 = vunpack.c.h.b16 %v1339
        %v1479 = vunpack.c.l.b16 %v1340
        %v1480 = vunpack.c.h.b16 %v1340
        %v1481 = vunpack.c.l.b16 %v1341
        %v1482 = vunpack.c.h.b16 %v1341
        %v1483 = vunpack.c.l.b16 %v1342
        %v1484 = vunpack.c.h.b16 %v1342
        %v1485 = vunpack.c.l.b16 %v1343
        %v1486 = vunpack.c.h.b16 %v1343
        %v1487 = vunpack.c.l.b16 %v1344
        %v1488 = vunpack.c.h.b16 %v1344
        %v1489 = vunpack.c.l.b16 %v1345
        %v1490 = vunpack.c.h.b16 %v1345
        %v1491 = vunpack.c.l.b16 %v1346
        %v1492 = vunpack.c.h.b16 %v1346
        %v1493 = vunpack.c.l.b16 %v1347
        %v1494 = vunpack.c.h.b16 %v1347
        %v1495 = vunpack.c.l.b16 %v1348
        %v1496 = vunpack.c.h.b16 %v1348
        %v1497 = vunpack.c.l.b16 %v1349
        %v1498 = vunpack.c.h.b16 %v1349
        %v1499 = vunpack.c.l.b16 %v1350
        %v1500 = vunpack.c.h.b16 %v1350
        %v1501 = vunpack.c.l.b16 %v1351
        %v1502 = vunpack.c.h.b16 %v1351
        %v1503 = vunpack.c.l.b16 %v1352
        %v1504 = vunpack.c.h.b16 %v1352
        %v1505 = vunpack.c.l.b16 %v1353
        %v1506 = vunpack.c.h.b16 %v1353
        %v1507 = vunpack.c.l.b16 %v1354
        %v1508 = vunpack.c.h.b16 %v1354
        %v1509 = vunpack.c.l.b16 %v1355
        %v1510 = vunpack.c.h.b16 %v1355
        %v1511 = vunpack.c.l.b16 %v1356
        %v1512 = vunpack.c.h.b16 %v1356
        %v1513 = vunpack.c.l.b16 %v1357
        %v1514 = vunpack.c.h.b16 %v1357
        %v1515 = vunpack.c.l.b16 %v1358
        %v1516 = vunpack.c.h.b16 %v1358
        %v1517 = vunpack.c.l.b16 %v1359
        %v1518 = vunpack.c.h.b16 %v1359
        %v1519 = vunpack.c.l.b16 %v1360
        %v1520 = vunpack.c.h.b16 %v1360
        %v1521 = vunpack.c.l.b16 %v1361
        %v1522 = vunpack.c.h.b16 %v1361
        %v1523 = vunpack.c.l.b16 %v1362
        %v1524 = vunpack.c.h.b16 %v1362
        %v1525 = vunpack.c.l.b16 %v1363
        %v1526 = vunpack.c.h.b16 %v1363
        %v1527 = vunpack.c.l.b16 %v1364
        %v1528 = vunpack.c.h.b16 %v1364
        %v1529 = vunpack.c.l.b16 %v1365
        %v1530 = vunpack.c.h.b16 %v1365
        %v1531 = vunpack.c.l.b16 %v1366
        %v1532 = vunpack.c.h.b16 %v1366
        %v1533 = vunpack.c.l.b16 %v1367
        %v1534 = vunpack.c.h.b16 %v1367
        %v1535 = vunpack.c.l.b16 %v1368
        %v1536 = vunpack.c.h.b16 %v1368
        %v1537 = vunpack.c.l.b16 %v1369
        %v1538 = vunpack.c.h.b16 %v1369
        %v1539 = vunpack.c.l.b16 %v1370
        %v1540 = vunpack.c.h.b16 %v1370
        %v1541 = vunpack.c.l.b16 %v1371
        %v1542 = vunpack.c.h.b16 %v1371
        %v1543 = vunpack.c.l.b16 %v1372
        %v1544 = vunpack.c.h.b16 %v1372
        %v1545 = vunpack.c.l.b16 %v1373
        %v1546 = vunpack.c.h.b16 %v1373
        %v1547 = vunpack.c.l.b16 %v1374
        %v1548 = vunpack.c.h.b16 %v1374
        %v1549 = vunpack.c.l.b16 %v1375
        %v1550 = vunpack.c.h.b16 %v1375
        %v1551 = vunpack.c.l.b16 %v1376
        %v1552 = vunpack.c.h.b16 %v1376
        %v1553 = vunpack.c.l.b16 %v1377
        %v1554 = vunpack.c.h.b16 %v1377
        %v1555 = vunpack.c.l.b16 %v1378
        %v1556 = vunpack.c.h.b16 %v1378
        %v1557 = vunpack.c.l.b16 %v1379
        %v1558 = vunpack.c.h.b16 %v1379
        %v1559 = vunpack.c.l.b16 %v1380
        %v1560 = vunpack.c.h.b16 %v1380
        %v1561 = vunpack.c.l.b16 %v1381
        %v1562 = vunpack.c.h.b16 %v1381
        %v1563 = vunpack.c.l.b16 %v1382
        %v1564 = vunpack.c.h.b16 %v1382
        %v1565 = vunpack.c.l.b16 %v1383
        %v1566 = vunpack.c.h.b16 %v1383
        %v1567 = vunpack.c.l.b16 %v1384
        %v1568 = vunpack.c.h.b16 %v1384
        %v1569 = vunpack.c.l.b16 %v1385
        %v1570 = vunpack.c.h.b16 %v1385
        %v1571 = vunpack.c.l.b16 %v1386
        %v1572 = vunpack.c.h.b16 %v1386
        %v1573 = vunpack.c.l.b16 %v1387
        %v1574 = vunpack.c.h.b16 %v1387
        %v1575 = vunpack.c.l.b16 %v1388
        %v1576 = vunpack.c.h.b16 %v1388
        %v1577 = vunpack.c.l.b16 %v1389
        %v1578 = vunpack.c.h.b16 %v1389
        %v1579 = vunpack.c.l.b16 %v1390
        %v1580 = vunpack.c.h.b16 %v1390
        %v1581 = vunpack.c.l.b16 %v1391
        %v1582 = vunpack.c.h.b16 %v1391
        %v1583 = vunpack.c.l.b16 %v1392
        %v1584 = vunpack.c.h.b16 %v1392
        %v1585 = vpack.c.b16 %v1459, %v1457
        %v1586 = vpack.c.b16 %v1460, %v1458
        %v1587 = vpack.c.b16 %v1463, %v1461
        %v1588 = vpack.c.b16 %v1464, %v1462
        %v1589 = vpack.c.b16 %v1467, %v1465
        %v1590 = vpack.c.b16 %v1468, %v1466
        %v1591 = vpack.c.b16 %v1471, %v1469
        %v1592 = vpack.c.b16 %v1472, %v1470
        %v1593 = vpack.c.b16 %v1475, %v1473
        %v1594 = vpack.c.b16 %v1476, %v1474
        %v1595 = vpack.c.b16 %v1479, %v1477
        %v1596 = vpack.c.b16 %v1480, %v1478
        %v1597 = vpack.c.b16 %v1483, %v1481
        %v1598 = vpack.c.b16 %v1484, %v1482
        %v1599 = vpack.c.b16 %v1487, %v1485
        %v1600 = vpack.c.b16 %v1488, %v1486
        %v1601 = vpack.c.b16 %v1491, %v1489
        %v1602 = vpack.c.b16 %v1492, %v1490
        %v1603 = vpack.c.b16 %v1495, %v1493
        %v1604 = vpack.c.b16 %v1496, %v1494
        %v1605 = vpack.c.b16 %v1499, %v1497
        %v1606 = vpack.c.b16 %v1500, %v1498
        %v1607 = vpack.c.b16 %v1503, %v1501
        %v1608 = vpack.c.b16 %v1504, %v1502
        %v1609 = vpack.c.b16 %v1507, %v1505
        %v1610 = vpack.c.b16 %v1508, %v1506
        %v1611 = vpack.c.b16 %v1511, %v1509
        %v1612 = vpack.c.b16 %v1512, %v1510
        %v1613 = vpack.c.b16 %v1515, %v1513
        %v1614 = vpack.c.b16 %v1516, %v1514
        %v1615 = vpack.c.b16 %v1519, %v1517
        %v1616 = vpack.c.b16 %v1520, %v1518
        %v1617 = vpack.c.b16 %v1523, %v1521
        %v1618 = vpack.c.b16 %v1524, %v1522
        %v1619 = vpack.c.b16 %v1527, %v1525
        %v1620 = vpack.c.b16 %v1528, %v1526
        %v1621 = vpack.c.b16 %v1531, %v1529
        %v1622 = vpack.c.b16 %v1532, %v1530
        %v1623 = vpack.c.b16 %v1535, %v1533
        %v1624 = vpack.c.b16 %v1536, %v1534
        %v1625 = vpack.c.b16 %v1539, %v1537
        %v1626 = vpack.c.b16 %v1540, %v1538
        %v1627 = vpack.c.b16 %v1543, %v1541
        %v1628 = vpack.c.b16 %v1544, %v1542
        %v1629 = vpack.c.b16 %v1547, %v1545
        %v1630 = vpack.c.b16 %v1548, %v1546
        %v1631 = vpack.c.b16 %v1551, %v1549
        %v1632 = vpack.c.b16 %v1552, %v1550
        %v1633 = vpack.c.b16 %v1555, %v1553
        %v1634 = vpack.c.b16 %v1556, %v1554
        %v1635 = vpack.c.b16 %v1559, %v1557
        %v1636 = vpack.c.b16 %v1560, %v1558
        %v1637 = vpack.c.b16 %v1563, %v1561
        %v1638 = vpack.c.b16 %v1564, %v1562
        %v1639 = vpack.c.b16 %v1567, %v1565
        %v1640 = vpack.c.b16 %v1568, %v1566
        %v1641 = vpack.c.b16 %v1571, %v1569
        %v1642 = vpack.c.b16 %v1572, %v1570
        %v1643 = vpack.c.b16 %v1575, %v1573
        %v1644 = vpack.c.b16 %v1576, %v1574
        %v1645 = vpack.c.b16 %v1579, %v1577
        %v1646 = vpack.c.b16 %v1580, %v1578
        %v1647 = vpack.c.b16 %v1583, %v1581
        %v1648 = vpack.c.b16 %v1584, %v1582
        %1713 = vmatprep.subr.bf16.mxu0 %v1586
        %1714 = vmatpush1.bf16.msra.mxu0 %v1585
        %1715 = vmatprep.subr.bf16.mxu0 %v1588
        %1716 = vmatpush1.bf16.msra.mxu0 %v1587
        %1717 = vmatprep.subr.bf16.mxu0 %v1590
        %1718 = vmatpush1.bf16.msra.mxu0 %v1589
        %1719 = vmatprep.subr.bf16.mxu0 %v1592
        %1720 = vmatpush1.bf16.msra.mxu0 %v1591
        %1721 = vmatprep.subr.bf16.mxu0 %v1594
        %1722 = vmatpush1.bf16.msra.mxu0 %v1593
        %1723 = vmatprep.subr.bf16.mxu0 %v1596
        %1724 = vmatpush1.bf16.msra.mxu0 %v1595
        %1725 = vmatprep.subr.bf16.mxu0 %v1598
        %1726 = vmatpush1.bf16.msra.mxu0 %v1597
        %1727 = vmatprep.subr.bf16.mxu0 %v1600
        %1728 = vmatpush1.bf16.msra.mxu0 %v1599
        %1729 = vmatprep.subr.bf16.mxu0 %v1602
        %1730 = vmatpush1.bf16.msra.mxu0 %v1601
        %1731 = vmatprep.subr.bf16.mxu0 %v1604
        %1732 = vmatpush1.bf16.msra.mxu0 %v1603
        %1733 = vmatprep.subr.bf16.mxu0 %v1606
        %1734 = vmatpush1.bf16.msra.mxu0 %v1605
        %1735 = vmatprep.subr.bf16.mxu0 %v1608
        %1736 = vmatpush1.bf16.msra.mxu0 %v1607
        %1737 = vmatprep.subr.bf16.mxu0 %v1610
        %1738 = vmatpush1.bf16.msra.mxu0 %v1609
        %1739 = vmatprep.subr.bf16.mxu0 %v1612
        %1740 = vmatpush1.bf16.msra.mxu0 %v1611
        %1741 = vmatprep.subr.bf16.mxu0 %v1614
        %1742 = vmatpush1.bf16.msra.mxu0 %v1613
        %1743 = vmatprep.subr.bf16.mxu0 %v1616
        %1744 = vmatpush1.bf16.msra.mxu0 %v1615
        %1745 = vmatprep.mubr.bf16.mxu0 %v1266
        %1746 = vmatmul.mubr.bf16.gmra.mrb[0].mxu0 %v1265
        %v1747 = vpop.f32.mrb[0].mxu0
        %v1748 = vadd.f32 0.0, %v1747
        %v1749 = vpop.f32.mrb[0].mxu0
        %v1750 = vadd.f32 0.0, %v1749
        %v1751 = vpop.f32.mrb[0].mxu0
        %v1752 = vadd.f32 0.0, %v1751
        %v1753 = vpop.f32.mrb[0].mxu0
        %v1754 = vadd.f32 0.0, %v1753
        %1755 = vmatprep.mubr.bf16.mxu0 %v1270
        %1756 = vmatmul.mubr.bf16.gmra.mrb[0].mxu0 %v1269
        %v1757 = vpop.f32.mrb[0].mxu0
        %v1758 = vadd.f32 0.0, %v1757
        %v1759 = vpop.f32.mrb[0].mxu0
        %v1760 = vadd.f32 0.0, %v1759
        %v1761 = vpop.f32.mrb[0].mxu0
        %v1762 = vadd.f32 0.0, %v1761
        %v1763 = vpop.f32.mrb[0].mxu0
        %v1764 = vadd.f32 0.0, %v1763
        %1765 = vmatprep.mubr.bf16.mxu0 %v1274
        %1766 = vmatmul.mubr.bf16.gmra.mrb[0].mxu0 %v1273
        %v1767 = vpop.f32.mrb[0].mxu0
        %v1768 = vadd.f32 0.0, %v1767
        %v1769 = vpop.f32.mrb[0].mxu0
        %v1770 = vadd.f32 0.0, %v1769
        %v1771 = vpop.f32.mrb[0].mxu0
        %v1772 = vadd.f32 0.0, %v1771
        %v1773 = vpop.f32.mrb[0].mxu0
        %v1774 = vadd.f32 0.0, %v1773
        %1775 = vmatprep.mubr.bf16.mxu0 %v1278
        %1776 = vmatmul.mubr.bf16.gmra.mrb[0].mxu0 %v1277
        %v1777 = vpop.f32.mrb[0].mxu0
        %v1778 = vadd.f32 0.0, %v1777
        %v1779 = vpop.f32.mrb[0].mxu0
        %v1780 = vadd.f32 0.0, %v1779
        %v1781 = vpop.f32.mrb[0].mxu0
        %v1782 = vadd.f32 0.0, %v1781
        %v1783 = vpop.f32.mrb[0].mxu0
        %v1784 = vadd.f32 0.0, %v1783
        %1785 = vmatprep.mubr.bf16.mxu0 %v1282
        %1786 = vmatmul.mubr.bf16.gmra.mrb[0].mxu0 %v1281
        %v1787 = vpop.f32.mrb[0].mxu0
        %v1788 = vadd.f32 0.0, %v1787
        %v1789 = vpop.f32.mrb[0].mxu0
        %v1790 = vadd.f32 0.0, %v1789
        %v1791 = vpop.f32.mrb[0].mxu0
        %v1792 = vadd.f32 0.0, %v1791
        %v1793 = vpop.f32.mrb[0].mxu0
        %v1794 = vadd.f32 0.0, %v1793
        %1795 = vmatprep.mubr.bf16.mxu0 %v1286
        %1796 = vmatmul.mubr.bf16.gmra.mrb[0].mxu0 %v1285
        %v1797 = vpop.f32.mrb[0].mxu0
        %v1798 = vadd.f32 0.0, %v1797
        %v1799 = vpop.f32.mrb[0].mxu0
        %v1800 = vadd.f32 0.0, %v1799
        %v1801 = vpop.f32.mrb[0].mxu0
        %v1802 = vadd.f32 0.0, %v1801
        %v1803 = vpop.f32.mrb[0].mxu0
        %v1804 = vadd.f32 0.0, %v1803
        %1805 = vmatprep.mubr.bf16.mxu0 %v1290
        %1806 = vmatmul.mubr.bf16.gmra.mrb[0].mxu0 %v1289
        %v1807 = vpop.f32.mrb[0].mxu0
        %v1808 = vadd.f32 0.0, %v1807
        %v1809 = vpop.f32.mrb[0].mxu0
        %v1810 = vadd.f32 0.0, %v1809
        %v1811 = vpop.f32.mrb[0].mxu0
        %v1812 = vadd.f32 0.0, %v1811
        %v1813 = vpop.f32.mrb[0].mxu0
        %v1814 = vadd.f32 0.0, %v1813
        %1815 = vmatprep.mubr.bf16.mxu0 %v1294
        %1816 = vmatmul.mubr.bf16.gmra.mrb[0].mxu0 %v1293
        %v1817 = vpop.f32.mrb[0].mxu0
        %v1818 = vadd.f32 0.0, %v1817
        %v1819 = vpop.f32.mrb[0].mxu0
        %v1820 = vadd.f32 0.0, %v1819
        %v1821 = vpop.f32.mrb[0].mxu0
        %v1822 = vadd.f32 0.0, %v1821
        %v1823 = vpop.f32.mrb[0].mxu0
        %v1824 = vadd.f32 0.0, %v1823
        %1825 = vmatprep.mubr.bf16.mxu0 %v1298
        %1826 = vmatmul.mubr.bf16.gmra.mrb[0].mxu0 %v1297
        %v1827 = vpop.f32.mrb[0].mxu0
        %v1828 = vadd.f32 0.0, %v1827
        %v1829 = vpop.f32.mrb[0].mxu0
        %v1830 = vadd.f32 0.0, %v1829
        %v1831 = vpop.f32.mrb[0].mxu0
        %v1832 = vadd.f32 0.0, %v1831
        %v1833 = vpop.f32.mrb[0].mxu0
        %v1834 = vadd.f32 0.0, %v1833
        %1835 = vmatprep.mubr.bf16.mxu0 %v1302
        %1836 = vmatmul.mubr.bf16.gmra.mrb[0].mxu0 %v1301
        %v1837 = vpop.f32.mrb[0].mxu0
        %v1838 = vadd.f32 0.0, %v1837
        %v1839 = vpop.f32.mrb[0].mxu0
        %v1840 = vadd.f32 0.0, %v1839
        %v1841 = vpop.f32.mrb[0].mxu0
        %v1842 = vadd.f32 0.0, %v1841
        %v1843 = vpop.f32.mrb[0].mxu0
        %v1844 = vadd.f32 0.0, %v1843
        %1845 = vmatprep.mubr.bf16.mxu0 %v1306
        %1846 = vmatmul.mubr.bf16.gmra.mrb[0].mxu0 %v1305
        %v1847 = vpop.f32.mrb[0].mxu0
        %v1848 = vadd.f32 0.0, %v1847
        %v1849 = vpop.f32.mrb[0].mxu0
        %v1850 = vadd.f32 0.0, %v1849
        %v1851 = vpop.f32.mrb[0].mxu0
        %v1852 = vadd.f32 0.0, %v1851
        %v1853 = vpop.f32.mrb[0].mxu0
        %v1854 = vadd.f32 0.0, %v1853
        %1855 = vmatprep.mubr.bf16.mxu0 %v1310
        %1856 = vmatmul.mubr.bf16.gmra.mrb[0].mxu0 %v1309
        %v1857 = vpop.f32.mrb[0].mxu0
        %v1858 = vadd.f32 0.0, %v1857
        %v1859 = vpop.f32.mrb[0].mxu0
        %v1860 = vadd.f32 0.0, %v1859
        %v1861 = vpop.f32.mrb[0].mxu0
        %v1862 = vadd.f32 0.0, %v1861
        %v1863 = vpop.f32.mrb[0].mxu0
        %v1864 = vadd.f32 0.0, %v1863
        %1865 = vmatprep.mubr.bf16.mxu0 %v1314
        %1866 = vmatmul.mubr.bf16.gmra.mrb[0].mxu0 %v1313
        %v1867 = vpop.f32.mrb[0].mxu0
        %v1868 = vadd.f32 0.0, %v1867
        %v1869 = vpop.f32.mrb[0].mxu0
        %v1870 = vadd.f32 0.0, %v1869
        %v1871 = vpop.f32.mrb[0].mxu0
        %v1872 = vadd.f32 0.0, %v1871
        %v1873 = vpop.f32.mrb[0].mxu0
        %v1874 = vadd.f32 0.0, %v1873
        %1875 = vmatprep.mubr.bf16.mxu0 %v1318
        %1876 = vmatmul.mubr.bf16.gmra.mrb[0].mxu0 %v1317
        %v1877 = vpop.f32.mrb[0].mxu0
        %v1878 = vadd.f32 0.0, %v1877
        %v1879 = vpop.f32.mrb[0].mxu0
        %v1880 = vadd.f32 0.0, %v1879
        %v1881 = vpop.f32.mrb[0].mxu0
        %v1882 = vadd.f32 0.0, %v1881
        %v1883 = vpop.f32.mrb[0].mxu0
        %v1884 = vadd.f32 0.0, %v1883
        %1885 = vmatprep.mubr.bf16.mxu0 %v1322
        %1886 = vmatmul.mubr.bf16.gmra.mrb[0].mxu0 %v1321
        %v1887 = vpop.f32.mrb[0].mxu0
        %v1888 = vadd.f32 0.0, %v1887
        %v1889 = vpop.f32.mrb[0].mxu0
        %v1890 = vadd.f32 0.0, %v1889
        %v1891 = vpop.f32.mrb[0].mxu0
        %v1892 = vadd.f32 0.0, %v1891
        %v1893 = vpop.f32.mrb[0].mxu0
        %v1894 = vadd.f32 0.0, %v1893
        %1895 = vmatprep.mubr.bf16.mxu0 %v1326
        %1896 = vmatmul.mubr.bf16.gmra.mrb[0].mxu0 %v1325
        %v1897 = vpop.f32.mrb[0].mxu0
        %v1898 = vadd.f32 0.0, %v1897
        %v1899 = vpop.f32.mrb[0].mxu0
        %v1900 = vadd.f32 0.0, %v1899
        %v1901 = vpop.f32.mrb[0].mxu0
        %v1902 = vadd.f32 0.0, %v1901
        %v1903 = vpop.f32.mrb[0].mxu0
        %v1904 = vadd.f32 0.0, %v1903
        %1905 = vdwg.mxu0
        %1906 = vmatprep.subr.bf16.mxu0 %v1618
        %1907 = vmatpush1.bf16.msra.mxu0 %v1617
        %1908 = vmatprep.subr.bf16.mxu0 %v1620
        %1909 = vmatpush1.bf16.msra.mxu0 %v1619
        %1910 = vmatprep.subr.bf16.mxu0 %v1622
        %1911 = vmatpush1.bf16.msra.mxu0 %v1621
        %1912 = vmatprep.subr.bf16.mxu0 %v1624
        %1913 = vmatpush1.bf16.msra.mxu0 %v1623
        %1914 = vmatprep.subr.bf16.mxu0 %v1626
        %1915 = vmatpush1.bf16.msra.mxu0 %v1625
        %1916 = vmatprep.subr.bf16.mxu0 %v1628
        %1917 = vmatpush1.bf16.msra.mxu0 %v1627
        %1918 = vmatprep.subr.bf16.mxu0 %v1630
        %1919 = vmatpush1.bf16.msra.mxu0 %v1629
        %1920 = vmatprep.subr.bf16.mxu0 %v1632
        %1921 = vmatpush1.bf16.msra.mxu0 %v1631
        %1922 = vmatprep.subr.bf16.mxu0 %v1634
        %1923 = vmatpush1.bf16.msra.mxu0 %v1633
        %1924 = vmatprep.subr.bf16.mxu0 %v1636
        %1925 = vmatpush1.bf16.msra.mxu0 %v1635
        %1926 = vmatprep.subr.bf16.mxu0 %v1638
        %1927 = vmatpush1.bf16.msra.mxu0 %v1637
        %1928 = vmatprep.subr.bf16.mxu0 %v1640
        %1929 = vmatpush1.bf16.msra.mxu0 %v1639
        %1930 = vmatprep.subr.bf16.mxu0 %v1642
        %1931 = vmatpush1.bf16.msra.mxu0 %v1641
        %1932 = vmatprep.subr.bf16.mxu0 %v1644
        %1933 = vmatpush1.bf16.msra.mxu0 %v1643
        %1934 = vmatprep.subr.bf16.mxu0 %v1646
        %1935 = vmatpush1.bf16.msra.mxu0 %v1645
        %1936 = vmatprep.subr.bf16.mxu0 %v1648
        %1937 = vmatpush1.bf16.msra.mxu0 %v1647
        %1938 = vmatprep.mubr.bf16.mxu0 %v1268
        %1939 = vmatmul.mubr.bf16.gmra.mrb[0].mxu0 %v1267
        %v1940 = vpop.f32.mrb[0].mxu0
        %v1941 = vadd.f32 %v1748, %v1940
        %v1942 = vpop.f32.mrb[0].mxu0
        %v1943 = vadd.f32 %v1750, %v1942
        %v1944 = vpop.f32.mrb[0].mxu0
        %v1945 = vadd.f32 %v1752, %v1944
        %v1946 = vpop.f32.mrb[0].mxu0
        %v1947 = vadd.f32 %v1754, %v1946
        %1948 = vmatprep.mubr.bf16.mxu0 %v1272
        %1949 = vmatmul.mubr.bf16.gmra.mrb[0].mxu0 %v1271
        %v1950 = vpop.f32.mrb[0].mxu0
        %v1951 = vadd.f32 %v1758, %v1950
        %v1952 = vpop.f32.mrb[0].mxu0
        %v1953 = vadd.f32 %v1760, %v1952
        %v1954 = vpop.f32.mrb[0].mxu0
        %v1955 = vadd.f32 %v1762, %v1954
        %v1956 = vpop.f32.mrb[0].mxu0
        %v1957 = vadd.f32 %v1764, %v1956
        %1958 = vmatprep.mubr.bf16.mxu0 %v1276
        %1959 = vmatmul.mubr.bf16.gmra.mrb[0].mxu0 %v1275
        %v1960 = vpop.f32.mrb[0].mxu0
        %v1961 = vadd.f32 %v1768, %v1960
        %v1962 = vpop.f32.mrb[0].mxu0
        %v1963 = vadd.f32 %v1770, %v1962
        %v1964 = vpop.f32.mrb[0].mxu0
        %v1965 = vadd.f32 %v1772, %v1964
        %v1966 = vpop.f32.mrb[0].mxu0
        %v1967 = vadd.f32 %v1774, %v1966
        %1968 = vmatprep.mubr.bf16.mxu0 %v1280
        %1969 = vmatmul.mubr.bf16.gmra.mrb[0].mxu0 %v1279
        %v1970 = vpop.f32.mrb[0].mxu0
        %v1971 = vadd.f32 %v1778, %v1970
        %v1972 = vpop.f32.mrb[0].mxu0
        %v1973 = vadd.f32 %v1780, %v1972
        %v1974 = vpop.f32.mrb[0].mxu0
        %v1975 = vadd.f32 %v1782, %v1974
        %v1976 = vpop.f32.mrb[0].mxu0
        %v1977 = vadd.f32 %v1784, %v1976
        %1978 = vmatprep.mubr.bf16.mxu0 %v1284
        %1979 = vmatmul.mubr.bf16.gmra.mrb[0].mxu0 %v1283
        %v1980 = vpop.f32.mrb[0].mxu0
        %v1981 = vadd.f32 %v1788, %v1980
        %v1982 = vpop.f32.mrb[0].mxu0
        %v1983 = vadd.f32 %v1790, %v1982
        %v1984 = vpop.f32.mrb[0].mxu0
        %v1985 = vadd.f32 %v1792, %v1984
        %v1986 = vpop.f32.mrb[0].mxu0
        %v1987 = vadd.f32 %v1794, %v1986
        %1988 = vmatprep.mubr.bf16.mxu0 %v1288
        %1989 = vmatmul.mubr.bf16.gmra.mrb[0].mxu0 %v1287
        %v1990 = vpop.f32.mrb[0].mxu0
        %v1991 = vadd.f32 %v1798, %v1990
        %v1992 = vpop.f32.mrb[0].mxu0
        %v1993 = vadd.f32 %v1800, %v1992
        %v1994 = vpop.f32.mrb[0].mxu0
        %v1995 = vadd.f32 %v1802, %v1994
        %v1996 = vpop.f32.mrb[0].mxu0
        %v1997 = vadd.f32 %v1804, %v1996
        %1998 = vmatprep.mubr.bf16.mxu0 %v1292
        %1999 = vmatmul.mubr.bf16.gmra.mrb[0].mxu0 %v1291
        %v2000 = vpop.f32.mrb[0].mxu0
        %v2001 = vadd.f32 %v1808, %v2000
        %v2002 = vpop.f32.mrb[0].mxu0
        %v2003 = vadd.f32 %v1810, %v2002
        %v2004 = vpop.f32.mrb[0].mxu0
        %v2005 = vadd.f32 %v1812, %v2004
        %v2006 = vpop.f32.mrb[0].mxu0
        %v2007 = vadd.f32 %v1814, %v2006
        %2008 = vmatprep.mubr.bf16.mxu0 %v1296
        %2009 = vmatmul.mubr.bf16.gmra.mrb[0].mxu0 %v1295
        %v2010 = vpop.f32.mrb[0].mxu0
        %v2011 = vadd.f32 %v1818, %v2010
        %v2012 = vpop.f32.mrb[0].mxu0
        %v2013 = vadd.f32 %v1820, %v2012
        %v2014 = vpop.f32.mrb[0].mxu0
        %v2015 = vadd.f32 %v1822, %v2014
        %v2016 = vpop.f32.mrb[0].mxu0
        %v2017 = vadd.f32 %v1824, %v2016
        %2018 = vmatprep.mubr.bf16.mxu0 %v1300
        %2019 = vmatmul.mubr.bf16.gmra.mrb[0].mxu0 %v1299
        %v2020 = vpop.f32.mrb[0].mxu0
        %v2021 = vadd.f32 %v1828, %v2020
        %v2022 = vpop.f32.mrb[0].mxu0
        %v2023 = vadd.f32 %v1830, %v2022
        %v2024 = vpop.f32.mrb[0].mxu0
        %v2025 = vadd.f32 %v1832, %v2024
        %v2026 = vpop.f32.mrb[0].mxu0
        %v2027 = vadd.f32 %v1834, %v2026
        %2028 = vmatprep.mubr.bf16.mxu0 %v1304
        %2029 = vmatmul.mubr.bf16.gmra.mrb[0].mxu0 %v1303
        %v2030 = vpop.f32.mrb[0].mxu0
        %v2031 = vadd.f32 %v1838, %v2030
        %v2032 = vpop.f32.mrb[0].mxu0
        %v2033 = vadd.f32 %v1840, %v2032
        %v2034 = vpop.f32.mrb[0].mxu0
        %v2035 = vadd.f32 %v1842, %v2034
        %v2036 = vpop.f32.mrb[0].mxu0
        %v2037 = vadd.f32 %v1844, %v2036
        %2038 = vmatprep.mubr.bf16.mxu0 %v1308
        %2039 = vmatmul.mubr.bf16.gmra.mrb[0].mxu0 %v1307
        %v2040 = vpop.f32.mrb[0].mxu0
        %v2041 = vadd.f32 %v1848, %v2040
        %v2042 = vpop.f32.mrb[0].mxu0
        %v2043 = vadd.f32 %v1850, %v2042
        %v2044 = vpop.f32.mrb[0].mxu0
        %v2045 = vadd.f32 %v1852, %v2044
        %v2046 = vpop.f32.mrb[0].mxu0
        %v2047 = vadd.f32 %v1854, %v2046
        %2048 = vmatprep.mubr.bf16.mxu0 %v1312
        %2049 = vmatmul.mubr.bf16.gmra.mrb[0].mxu0 %v1311
        %v2050 = vpop.f32.mrb[0].mxu0
        %v2051 = vadd.f32 %v1858, %v2050
        %v2052 = vpop.f32.mrb[0].mxu0
        %v2053 = vadd.f32 %v1860, %v2052
        %v2054 = vpop.f32.mrb[0].mxu0
        %v2055 = vadd.f32 %v1862, %v2054
        %v2056 = vpop.f32.mrb[0].mxu0
        %v2057 = vadd.f32 %v1864, %v2056
        %2058 = vmatprep.mubr.bf16.mxu0 %v1316
        %2059 = vmatmul.mubr.bf16.gmra.mrb[0].mxu0 %v1315
        %v2060 = vpop.f32.mrb[0].mxu0
        %v2061 = vadd.f32 %v1868, %v2060
        %v2062 = vpop.f32.mrb[0].mxu0
        %v2063 = vadd.f32 %v1870, %v2062
        %v2064 = vpop.f32.mrb[0].mxu0
        %v2065 = vadd.f32 %v1872, %v2064
        %v2066 = vpop.f32.mrb[0].mxu0
        %v2067 = vadd.f32 %v1874, %v2066
        %2068 = vmatprep.mubr.bf16.mxu0 %v1320
        %2069 = vmatmul.mubr.bf16.gmra.mrb[0].mxu0 %v1319
        %v2070 = vpop.f32.mrb[0].mxu0
        %v2071 = vadd.f32 %v1878, %v2070
        %v2072 = vpop.f32.mrb[0].mxu0
        %v2073 = vadd.f32 %v1880, %v2072
        %v2074 = vpop.f32.mrb[0].mxu0
        %v2075 = vadd.f32 %v1882, %v2074
        %v2076 = vpop.f32.mrb[0].mxu0
        %v2077 = vadd.f32 %v1884, %v2076
        %2078 = vmatprep.mubr.bf16.mxu0 %v1324
        %2079 = vmatmul.mubr.bf16.gmra.mrb[0].mxu0 %v1323
        %v2080 = vpop.f32.mrb[0].mxu0
        %v2081 = vadd.f32 %v1888, %v2080
        %v2082 = vpop.f32.mrb[0].mxu0
        %v2083 = vadd.f32 %v1890, %v2082
        %v2084 = vpop.f32.mrb[0].mxu0
        %v2085 = vadd.f32 %v1892, %v2084
        %v2086 = vpop.f32.mrb[0].mxu0
        %v2087 = vadd.f32 %v1894, %v2086
        %2088 = vmatprep.mubr.bf16.mxu0 %v1328
        %2089 = vmatmul.mubr.bf16.gmra.mrb[0].mxu0 %v1327
        %v2090 = vpop.f32.mrb[0].mxu0
        %v2091 = vadd.f32 %v1898, %v2090
        %v2092 = vpop.f32.mrb[0].mxu0
        %v2093 = vadd.f32 %v1900, %v2092
        %v2094 = vpop.f32.mrb[0].mxu0
        %v2095 = vadd.f32 %v1902, %v2094
        %v2096 = vpop.f32.mrb[0].mxu0
        %v2097 = vadd.f32 %v1904, %v2096
        %2098 = vdwg.mxu0
        %v2099 = vpack.c.bf16 %v1945, %v1941
        %v2100 = vpack.c.bf16 %v1947, %v1943
        %v2101 = vpack.c.bf16 %v1955, %v1951
        %v2102 = vpack.c.bf16 %v1957, %v1953
        %v2103 = vpack.c.bf16 %v1965, %v1961
        %v2104 = vpack.c.bf16 %v1967, %v1963
        %v2105 = vpack.c.bf16 %v1975, %v1971
        %v2106 = vpack.c.bf16 %v1977, %v1973
        %v2107 = vpack.c.bf16 %v1985, %v1981
        %v2108 = vpack.c.bf16 %v1987, %v1983
        %v2109 = vpack.c.bf16 %v1995, %v1991
        %v2110 = vpack.c.bf16 %v1997, %v1993
        %v2111 = vpack.c.bf16 %v2005, %v2001
        %v2112 = vpack.c.bf16 %v2007, %v2003
        %v2113 = vpack.c.bf16 %v2015, %v2011
        %v2114 = vpack.c.bf16 %v2017, %v2013
        %v2115 = vpack.c.bf16 %v2025, %v2021
        %v2116 = vpack.c.bf16 %v2027, %v2023
        %v2117 = vpack.c.bf16 %v2035, %v2031
        %v2118 = vpack.c.bf16 %v2037, %v2033
        %v2119 = vpack.c.bf16 %v2045, %v2041
        %v2120 = vpack.c.bf16 %v2047, %v2043
        %v2121 = vpack.c.bf16 %v2055, %v2051
        %v2122 = vpack.c.bf16 %v2057, %v2053
        %v2123 = vpack.c.bf16 %v2065, %v2061
        %v2124 = vpack.c.bf16 %v2067, %v2063
        %v2125 = vpack.c.bf16 %v2075, %v2071
        %v2126 = vpack.c.bf16 %v2077, %v2073
        %v2127 = vpack.c.bf16 %v2085, %v2081
        %v2128 = vpack.c.bf16 %v2087, %v2083
        %v2129 = vpack.c.bf16 %v2095, %v2091
        %v2130 = vpack.c.bf16 %v2097, %v2093
        %v2131 = vld [vmem:[%s4] sm:$0x3]
        %v2134 = vunpack.c.l.s4 1966171168
        %v2135 = vunpack.c.0.s8 %v2134
        %v2136 = vlaneseq
        %v2137 = vshrl.u32 %v2136, 7
        %v2138 = vsub.s32 %v2135, %v2137
        %v2139 = vrot.slane %v2131, %v2138
        %v2140 = vcombine.high %v2139, %v2139
        %v2142 = vunpack.c.l.s4 1966171168
        %v2143 = vunpack.c.0.s8 %v2142
        %v2144 = vlaneseq
        %v2145 = vshrl.u32 %v2144, 7
        %v2146 = vsub.s32 %v2143, %v2145
        %v2147 = vrot.slane %v2139, %v2146
        %v2149 = vunpack.c.l.s4 1966171168
        %v2150 = vunpack.c.0.s8 %v2149
        %v2151 = vlaneseq
        %v2152 = vshrl.u32 %v2151, 7
        %v2153 = vsub.s32 %v2150, %v2152
        %v2154 = vrot.slane %v2140, %v2153
        %v2156 = vpack.i.b16 %v2147, %v2147
        %v2158 = vlaneseq
        %v2159 = vshrl.u32 %v2158, 7
        %v2160 = vsub.s32 0, %v2159
        %v2161 = vrot.slane %v2156, %v2160
        %v2163 = vpack.i.b16 %v2154, %v2154
        %v2165 = vlaneseq
        %v2166 = vshrl.u32 %v2165, 7
        %v2167 = vsub.s32 0, %v2166
        %v2168 = vrot.slane %v2163, %v2167
        %v2169 = vadd.bf16 %v2099, %v2161
        %v2170 = vadd.bf16 %v2100, %v2168
        %v2171 = vadd.bf16 %v2101, %v2161
        %v2172 = vadd.bf16 %v2102, %v2168
        %v2173 = vadd.bf16 %v2103, %v2161
        %v2174 = vadd.bf16 %v2104, %v2168
        %v2175 = vadd.bf16 %v2105, %v2161
        %v2176 = vadd.bf16 %v2106, %v2168
        %v2177 = vadd.bf16 %v2107, %v2161
        %v2178 = vadd.bf16 %v2108, %v2168
        %v2179 = vadd.bf16 %v2109, %v2161
        %v2180 = vadd.bf16 %v2110, %v2168
        %v2181 = vadd.bf16 %v2111, %v2161
        %v2182 = vadd.bf16 %v2112, %v2168
        %v2183 = vadd.bf16 %v2113, %v2161
        %v2184 = vadd.bf16 %v2114, %v2168
        %v2185 = vadd.bf16 %v2115, %v2161
        %v2186 = vadd.bf16 %v2116, %v2168
        %v2187 = vadd.bf16 %v2117, %v2161
        %v2188 = vadd.bf16 %v2118, %v2168
        %v2189 = vadd.bf16 %v2119, %v2161
        %v2190 = vadd.bf16 %v2120, %v2168
        %v2191 = vadd.bf16 %v2121, %v2161
        %v2192 = vadd.bf16 %v2122, %v2168
        %v2193 = vadd.bf16 %v2123, %v2161
        %v2194 = vadd.bf16 %v2124, %v2168
        %v2195 = vadd.bf16 %v2125, %v2161
        %v2196 = vadd.bf16 %v2126, %v2168
        %v2197 = vadd.bf16 %v2127, %v2161
        %v2198 = vadd.bf16 %v2128, %v2168
        %v2199 = vadd.bf16 %v2129, %v2161
        %v2200 = vadd.bf16 %v2130, %v2168
        %v2201 = vmul.bf16 %v2169, 1045249613
        %v2202 = vmul.bf16 %v2170, 1045249613
        %v2203 = vmul.bf16 %v2171, 1045249613
        %v2204 = vmul.bf16 %v2172, 1045249613
        %v2205 = vmul.bf16 %v2173, 1045249613
        %v2206 = vmul.bf16 %v2174, 1045249613
        %v2207 = vmul.bf16 %v2175, 1045249613
        %v2208 = vmul.bf16 %v2176, 1045249613
        %v2209 = vmul.bf16 %v2177, 1045249613
        %v2210 = vmul.bf16 %v2178, 1045249613
        %v2211 = vmul.bf16 %v2179, 1045249613
        %v2212 = vmul.bf16 %v2180, 1045249613
        %v2213 = vmul.bf16 %v2181, 1045249613
        %v2214 = vmul.bf16 %v2182, 1045249613
        %v2215 = vmul.bf16 %v2183, 1045249613
        %v2216 = vmul.bf16 %v2184, 1045249613
        %v2217 = vmul.bf16 %v2185, 1045249613
        %v2218 = vmul.bf16 %v2186, 1045249613
        %v2219 = vmul.bf16 %v2187, 1045249613
        %v2220 = vmul.bf16 %v2188, 1045249613
        %v2221 = vmul.bf16 %v2189, 1045249613
        %v2222 = vmul.bf16 %v2190, 1045249613
        %v2223 = vmul.bf16 %v2191, 1045249613
        %v2224 = vmul.bf16 %v2192, 1045249613
        %v2225 = vmul.bf16 %v2193, 1045249613
        %v2226 = vmul.bf16 %v2194, 1045249613
        %v2227 = vmul.bf16 %v2195, 1045249613
        %v2228 = vmul.bf16 %v2196, 1045249613
        %v2229 = vmul.bf16 %v2197, 1045249613
        %v2230 = vmul.bf16 %v2198, 1045249613
        %v2231 = vmul.bf16 %v2199, 1045249613
        %v2232 = vmul.bf16 %v2200, 1045249613
        %v2233 = vmax.bf16 %v2169, %v2201
        %v2234 = vmax.bf16 %v2170, %v2202
        %v2235 = vmax.bf16 %v2171, %v2203
        %v2236 = vmax.bf16 %v2172, %v2204
        %v2237 = vmax.bf16 %v2173, %v2205
        %v2238 = vmax.bf16 %v2174, %v2206
        %v2239 = vmax.bf16 %v2175, %v2207
        %v2240 = vmax.bf16 %v2176, %v2208
        %v2241 = vmax.bf16 %v2177, %v2209
        %v2242 = vmax.bf16 %v2178, %v2210
        %v2243 = vmax.bf16 %v2179, %v2211
        %v2244 = vmax.bf16 %v2180, %v2212
        %v2245 = vmax.bf16 %v2181, %v2213
        %v2246 = vmax.bf16 %v2182, %v2214
        %v2247 = vmax.bf16 %v2183, %v2215
        %v2248 = vmax.bf16 %v2184, %v2216
        %v2249 = vmax.bf16 %v2185, %v2217
        %v2250 = vmax.bf16 %v2186, %v2218
        %v2251 = vmax.bf16 %v2187, %v2219
        %v2252 = vmax.bf16 %v2188, %v2220
        %v2253 = vmax.bf16 %v2189, %v2221
        %v2254 = vmax.bf16 %v2190, %v2222
        %v2255 = vmax.bf16 %v2191, %v2223
        %v2256 = vmax.bf16 %v2192, %v2224
        %v2257 = vmax.bf16 %v2193, %v2225
        %v2258 = vmax.bf16 %v2194, %v2226
        %v2259 = vmax.bf16 %v2195, %v2227
        %v2260 = vmax.bf16 %v2196, %v2228
        %v2261 = vmax.bf16 %v2197, %v2229
        %v2262 = vmax.bf16 %v2198, %v2230
        %v2263 = vmax.bf16 %v2199, %v2231
        %v2264 = vmax.bf16 %v2200, %v2232
        %v2265 = vld [vmem:[%s5] sm:$0xf]
        %v2266 = vld [vmem:[%s5 + $0x4] sm:$0xf]
        %v2267 = vld [vmem:[%s5 + $0x8] sm:$0xf]
        %v2268 = vld [vmem:[%s5 + $0xc] sm:$0xf]
        %v2269 = vld [vmem:[%s5 + $0x10] sm:$0xf]
        %v2270 = vld [vmem:[%s5 + $0x14] sm:$0xf]
        %v2271 = vld [vmem:[%s5 + $0x18] sm:$0xf]
        %v2272 = vld [vmem:[%s5 + $0x1c] sm:$0xf]
        %v2273 = vld [vmem:[%s5 + $0x20] sm:$0xf]
        %v2274 = vld [vmem:[%s5 + $0x24] sm:$0xf]
        %v2275 = vld [vmem:[%s5 + $0x28] sm:$0xf]
        %v2276 = vld [vmem:[%s5 + $0x2c] sm:$0xf]
        %v2277 = vld [vmem:[%s5 + $0x30] sm:$0xf]
        %v2278 = vld [vmem:[%s5 + $0x34] sm:$0xf]
        %v2279 = vld [vmem:[%s5 + $0x38] sm:$0xf]
        %v2280 = vld [vmem:[%s5 + $0x3c] sm:$0xf]
        %v2281 = vld [vmem:[%s5 + $0x40] sm:$0xf]
        %v2282 = vld [vmem:[%s5 + $0x44] sm:$0xf]
        %v2283 = vld [vmem:[%s5 + $0x48] sm:$0xf]
        %v2284 = vld [vmem:[%s5 + $0x4c] sm:$0xf]
        %v2285 = vld [vmem:[%s5 + $0x50] sm:$0xf]
        %v2286 = vld [vmem:[%s5 + $0x54] sm:$0xf]
        %v2287 = vld [vmem:[%s5 + $0x58] sm:$0xf]
        %v2288 = vld [vmem:[%s5 + $0x5c] sm:$0xf]
        %v2289 = vld [vmem:[%s5 + $0x60] sm:$0xf]
        %v2290 = vld [vmem:[%s5 + $0x64] sm:$0xf]
        %v2291 = vld [vmem:[%s5 + $0x68] sm:$0xf]
        %v2292 = vld [vmem:[%s5 + $0x6c] sm:$0xf]
        %v2293 = vld [vmem:[%s5 + $0x70] sm:$0xf]
        %v2294 = vld [vmem:[%s5 + $0x74] sm:$0xf]
        %v2295 = vld [vmem:[%s5 + $0x78] sm:$0xf]
        %v2296 = vld [vmem:[%s5 + $0x7c] sm:$0xf]
        %v2329 = vunpack.c.l.b16 %v2265
        %v2330 = vunpack.c.l.b16 %v2266
        %v2331 = vunpack.c.l.b16 %v2267
        %v2332 = vunpack.c.l.b16 %v2268
        %v2333 = vunpack.c.l.b16 %v2269
        %v2334 = vunpack.c.l.b16 %v2270
        %v2335 = vunpack.c.l.b16 %v2271
        %v2336 = vunpack.c.l.b16 %v2272
        %v2337 = vunpack.c.l.b16 %v2273
        %v2338 = vunpack.c.l.b16 %v2274
        %v2339 = vunpack.c.l.b16 %v2275
        %v2340 = vunpack.c.l.b16 %v2276
        %v2341 = vunpack.c.l.b16 %v2277
        %v2342 = vunpack.c.l.b16 %v2278
        %v2343 = vunpack.c.l.b16 %v2279
        %v2344 = vunpack.c.l.b16 %v2280
        %v2345 = vunpack.c.l.b16 %v2281
        %v2346 = vunpack.c.l.b16 %v2282
        %v2347 = vunpack.c.l.b16 %v2283
        %v2348 = vunpack.c.l.b16 %v2284
        %v2349 = vunpack.c.l.b16 %v2285
        %v2350 = vunpack.c.l.b16 %v2286
        %v2351 = vunpack.c.l.b16 %v2287
        %v2352 = vunpack.c.l.b16 %v2288
        %v2353 = vunpack.c.l.b16 %v2289
        %v2354 = vunpack.c.l.b16 %v2290
        %v2355 = vunpack.c.l.b16 %v2291
        %v2356 = vunpack.c.l.b16 %v2292
        %v2357 = vunpack.c.l.b16 %v2293
        %v2358 = vunpack.c.l.b16 %v2294
        %v2359 = vunpack.c.l.b16 %v2295
        %v2360 = vunpack.c.l.b16 %v2296
        %v2361 = vpack.c.b16 %v2330, %v2329
        %v2362 = vpack.c.b16 %v2332, %v2331
        %v2363 = vpack.c.b16 %v2334, %v2333
        %v2364 = vpack.c.b16 %v2336, %v2335
        %v2365 = vpack.c.b16 %v2338, %v2337
        %v2366 = vpack.c.b16 %v2340, %v2339
        %v2367 = vpack.c.b16 %v2342, %v2341
        %v2368 = vpack.c.b16 %v2344, %v2343
        %v2369 = vpack.c.b16 %v2346, %v2345
        %v2370 = vpack.c.b16 %v2348, %v2347
        %v2371 = vpack.c.b16 %v2350, %v2349
        %v2372 = vpack.c.b16 %v2352, %v2351
        %v2373 = vpack.c.b16 %v2354, %v2353
        %v2374 = vpack.c.b16 %v2356, %v2355
        %v2375 = vpack.c.b16 %v2358, %v2357
        %v2376 = vpack.c.b16 %v2360, %v2359
        %2393 = vmatprep.subr.bf16.mxu0 0
        %2394 = vmatpush1.bf16.msra.mxu0 %v2361
        %2395 = vmatprep.subr.bf16.mxu0 0
        %2396 = vmatpush1.bf16.msra.mxu0 %v2362
        %2397 = vmatprep.subr.bf16.mxu0 0
        %2398 = vmatpush1.bf16.msra.mxu0 %v2363
        %2399 = vmatprep.subr.bf16.mxu0 0
        %2400 = vmatpush1.bf16.msra.mxu0 %v2364
        %2401 = vmatprep.subr.bf16.mxu0 0
        %2402 = vmatpush1.bf16.msra.mxu0 %v2365
        %2403 = vmatprep.subr.bf16.mxu0 0
        %2404 = vmatpush1.bf16.msra.mxu0 %v2366
        %2405 = vmatprep.subr.bf16.mxu0 0
        %2406 = vmatpush1.bf16.msra.mxu0 %v2367
        %2407 = vmatprep.subr.bf16.mxu0 0
        %2408 = vmatpush1.bf16.msra.mxu0 %v2368
        %2409 = vmatprep.subr.bf16.mxu0 0
        %2410 = vmatpush1.bf16.msra.mxu0 %v2369
        %2411 = vmatprep.subr.bf16.mxu0 0
        %2412 = vmatpush1.bf16.msra.mxu0 %v2370
        %2413 = vmatprep.subr.bf16.mxu0 0
        %2414 = vmatpush1.bf16.msra.mxu0 %v2371
        %2415 = vmatprep.subr.bf16.mxu0 0
        %2416 = vmatpush1.bf16.msra.mxu0 %v2372
        %2417 = vmatprep.subr.bf16.mxu0 0
        %2418 = vmatpush1.bf16.msra.mxu0 %v2373
        %2419 = vmatprep.subr.bf16.mxu0 0
        %2420 = vmatpush1.bf16.msra.mxu0 %v2374
        %2421 = vmatprep.subr.bf16.mxu0 0
        %2422 = vmatpush1.bf16.msra.mxu0 %v2375
        %2423 = vmatprep.subr.bf16.mxu0 0
        %2424 = vmatpush1.bf16.msra.mxu0 %v2376
        %2425 = vmatprep.mubr.bf16.mxu0 %v2234
        %2426 = vmatmul.mubr.bf16.gmra.mrb[0].mxu0 %v2233
        %v2427 = vpop.f32.mrb[0].mxu0
        %v2428 = vadd.f32 0.0, %v2427
        %v2429 = vpop.f32.mrb[0].mxu0
        %v2430 = vpop.f32.mrb[0].mxu0
        %v2431 = vadd.f32 0.0, %v2430
        %v2432 = vpop.f32.mrb[0].mxu0
        %2433 = vmatprep.mubr.bf16.mxu0 %v2236
        %2434 = vmatmul.mubr.bf16.gmra.mrb[0].mxu0 %v2235
        %v2435 = vpop.f32.mrb[0].mxu0
        %v2436 = vadd.f32 0.0, %v2435
        %v2437 = vpop.f32.mrb[0].mxu0
        %v2438 = vpop.f32.mrb[0].mxu0
        %v2439 = vadd.f32 0.0, %v2438
        %v2440 = vpop.f32.mrb[0].mxu0
        %2441 = vmatprep.mubr.bf16.mxu0 %v2238
        %2442 = vmatmul.mubr.bf16.gmra.mrb[0].mxu0 %v2237
        %v2443 = vpop.f32.mrb[0].mxu0
        %v2444 = vadd.f32 0.0, %v2443
        %v2445 = vpop.f32.mrb[0].mxu0
        %v2446 = vpop.f32.mrb[0].mxu0
        %v2447 = vadd.f32 0.0, %v2446
        %v2448 = vpop.f32.mrb[0].mxu0
        %2449 = vmatprep.mubr.bf16.mxu0 %v2240
        %2450 = vmatmul.mubr.bf16.gmra.mrb[0].mxu0 %v2239
        %v2451 = vpop.f32.mrb[0].mxu0
        %v2452 = vadd.f32 0.0, %v2451
        %v2453 = vpop.f32.mrb[0].mxu0
        %v2454 = vpop.f32.mrb[0].mxu0
        %v2455 = vadd.f32 0.0, %v2454
        %v2456 = vpop.f32.mrb[0].mxu0
        %2457 = vmatprep.mubr.bf16.mxu0 %v2242
        %2458 = vmatmul.mubr.bf16.gmra.mrb[0].mxu0 %v2241
        %v2459 = vpop.f32.mrb[0].mxu0
        %v2460 = vadd.f32 0.0, %v2459
        %v2461 = vpop.f32.mrb[0].mxu0
        %v2462 = vpop.f32.mrb[0].mxu0
        %v2463 = vadd.f32 0.0, %v2462
        %v2464 = vpop.f32.mrb[0].mxu0
        %2465 = vmatprep.mubr.bf16.mxu0 %v2244
        %2466 = vmatmul.mubr.bf16.gmra.mrb[0].mxu0 %v2243
        %v2467 = vpop.f32.mrb[0].mxu0
        %v2468 = vadd.f32 0.0, %v2467
        %v2469 = vpop.f32.mrb[0].mxu0
        %v2470 = vpop.f32.mrb[0].mxu0
        %v2471 = vadd.f32 0.0, %v2470
        %v2472 = vpop.f32.mrb[0].mxu0
        %2473 = vmatprep.mubr.bf16.mxu0 %v2246
        %2474 = vmatmul.mubr.bf16.gmra.mrb[0].mxu0 %v2245
        %v2475 = vpop.f32.mrb[0].mxu0
        %v2476 = vadd.f32 0.0, %v2475
        %v2477 = vpop.f32.mrb[0].mxu0
        %v2478 = vpop.f32.mrb[0].mxu0
        %v2479 = vadd.f32 0.0, %v2478
        %v2480 = vpop.f32.mrb[0].mxu0
        %2481 = vmatprep.mubr.bf16.mxu0 %v2248
        %2482 = vmatmul.mubr.bf16.gmra.mrb[0].mxu0 %v2247
        %v2483 = vpop.f32.mrb[0].mxu0
        %v2484 = vadd.f32 0.0, %v2483
        %v2485 = vpop.f32.mrb[0].mxu0
        %v2486 = vpop.f32.mrb[0].mxu0
        %v2487 = vadd.f32 0.0, %v2486
        %v2488 = vpop.f32.mrb[0].mxu0
        %2489 = vmatprep.mubr.bf16.mxu0 %v2250
        %2490 = vmatmul.mubr.bf16.gmra.mrb[0].mxu0 %v2249
        %v2491 = vpop.f32.mrb[0].mxu0
        %v2492 = vadd.f32 0.0, %v2491
        %v2493 = vpop.f32.mrb[0].mxu0
        %v2494 = vpop.f32.mrb[0].mxu0
        %v2495 = vadd.f32 0.0, %v2494
        %v2496 = vpop.f32.mrb[0].mxu0
        %2497 = vmatprep.mubr.bf16.mxu0 %v2252
        %2498 = vmatmul.mubr.bf16.gmra.mrb[0].mxu0 %v2251
        %v2499 = vpop.f32.mrb[0].mxu0
        %v2500 = vadd.f32 0.0, %v2499
        %v2501 = vpop.f32.mrb[0].mxu0
        %v2502 = vpop.f32.mrb[0].mxu0
        %v2503 = vadd.f32 0.0, %v2502
        %v2504 = vpop.f32.mrb[0].mxu0
        %2505 = vmatprep.mubr.bf16.mxu0 %v2254
        %2506 = vmatmul.mubr.bf16.gmra.mrb[0].mxu0 %v2253
        %v2507 = vpop.f32.mrb[0].mxu0
        %v2508 = vadd.f32 0.0, %v2507
        %v2509 = vpop.f32.mrb[0].mxu0
        %v2510 = vpop.f32.mrb[0].mxu0
        %v2511 = vadd.f32 0.0, %v2510
        %v2512 = vpop.f32.mrb[0].mxu0
        %2513 = vmatprep.mubr.bf16.mxu0 %v2256
        %2514 = vmatmul.mubr.bf16.gmra.mrb[0].mxu0 %v2255
        %v2515 = vpop.f32.mrb[0].mxu0
        %v2516 = vadd.f32 0.0, %v2515
        %v2517 = vpop.f32.mrb[0].mxu0
        %v2518 = vpop.f32.mrb[0].mxu0
        %v2519 = vadd.f32 0.0, %v2518
        %v2520 = vpop.f32.mrb[0].mxu0
        %2521 = vmatprep.mubr.bf16.mxu0 %v2258
        %2522 = vmatmul.mubr.bf16.gmra.mrb[0].mxu0 %v2257
        %v2523 = vpop.f32.mrb[0].mxu0
        %v2524 = vadd.f32 0.0, %v2523
        %v2525 = vpop.f32.mrb[0].mxu0
        %v2526 = vpop.f32.mrb[0].mxu0
        %v2527 = vadd.f32 0.0, %v2526
        %v2528 = vpop.f32.mrb[0].mxu0
        %2529 = vmatprep.mubr.bf16.mxu0 %v2260
        %2530 = vmatmul.mubr.bf16.gmra.mrb[0].mxu0 %v2259
        %v2531 = vpop.f32.mrb[0].mxu0
        %v2532 = vadd.f32 0.0, %v2531
        %v2533 = vpop.f32.mrb[0].mxu0
        %v2534 = vpop.f32.mrb[0].mxu0
        %v2535 = vadd.f32 0.0, %v2534
        %v2536 = vpop.f32.mrb[0].mxu0
        %2537 = vmatprep.mubr.bf16.mxu0 %v2262
        %2538 = vmatmul.mubr.bf16.gmra.mrb[0].mxu0 %v2261
        %v2539 = vpop.f32.mrb[0].mxu0
        %v2540 = vadd.f32 0.0, %v2539
        %v2541 = vpop.f32.mrb[0].mxu0
        %v2542 = vpop.f32.mrb[0].mxu0
        %v2543 = vadd.f32 0.0, %v2542
        %v2544 = vpop.f32.mrb[0].mxu0
        %2545 = vmatprep.mubr.bf16.mxu0 %v2264
        %2546 = vmatmul.mubr.bf16.gmra.mrb[0].mxu0 %v2263
        %v2547 = vpop.f32.mrb[0].mxu0
        %v2548 = vadd.f32 0.0, %v2547
        %v2549 = vpop.f32.mrb[0].mxu0
        %v2550 = vpop.f32.mrb[0].mxu0
        %v2551 = vadd.f32 0.0, %v2550
        %v2552 = vpop.f32.mrb[0].mxu0
        %2553 = vdwg.mxu0
        %v2554 = vpack.c.bf16 %v2431, %v2428
        %v2555 = vpack.c.bf16 %v2439, %v2436
        %v2556 = vpack.c.bf16 %v2447, %v2444
        %v2557 = vpack.c.bf16 %v2455, %v2452
        %v2558 = vpack.c.bf16 %v2463, %v2460
        %v2559 = vpack.c.bf16 %v2471, %v2468
        %v2560 = vpack.c.bf16 %v2479, %v2476
        %v2561 = vpack.c.bf16 %v2487, %v2484
        %v2562 = vpack.c.bf16 %v2495, %v2492
        %v2563 = vpack.c.bf16 %v2503, %v2500
        %v2564 = vpack.c.bf16 %v2511, %v2508
        %v2565 = vpack.c.bf16 %v2519, %v2516
        %v2566 = vpack.c.bf16 %v2527, %v2524
        %v2567 = vpack.c.bf16 %v2535, %v2532
        %v2568 = vpack.c.bf16 %v2543, %v2540
        %v2569 = vpack.c.bf16 %v2551, %v2548
        %v2570 = vld [vmem:[%s6] sm:$0x1]
        %v2572 = vpack.i.b16 %v2570, %v2570
        %v2574 = vlaneseq
        %v2575 = vshrl.u32 %v2574, 7
        %v2576 = vsub.s32 0, %v2575
        %v2577 = vrot.slane %v2572, %v2576
        %v2578 = vadd.bf16 %v2554, %v2577
        %v2579 = vadd.bf16 %v2555, %v2577
        %v2580 = vadd.bf16 %v2556, %v2577
        %v2581 = vadd.bf16 %v2557, %v2577
        %v2582 = vadd.bf16 %v2558, %v2577
        %v2583 = vadd.bf16 %v2559, %v2577
        %v2584 = vadd.bf16 %v2560, %v2577
        %v2585 = vadd.bf16 %v2561, %v2577
        %v2586 = vadd.bf16 %v2562, %v2577
        %v2587 = vadd.bf16 %v2563, %v2577
        %v2588 = vadd.bf16 %v2564, %v2577
        %v2589 = vadd.bf16 %v2565, %v2577
        %v2590 = vadd.bf16 %v2566, %v2577
        %v2591 = vadd.bf16 %v2567, %v2577
        %v2592 = vadd.bf16 %v2568, %v2577
        %v2593 = vadd.bf16 %v2569, %v2577
        %v2594 = vmul.bf16 %v2578, 1045249613
        %v2595 = vmul.bf16 %v2579, 1045249613
        %v2596 = vmul.bf16 %v2580, 1045249613
        %v2597 = vmul.bf16 %v2581, 1045249613
        %v2598 = vmul.bf16 %v2582, 1045249613
        %v2599 = vmul.bf16 %v2583, 1045249613
        %v2600 = vmul.bf16 %v2584, 1045249613
        %v2601 = vmul.bf16 %v2585, 1045249613
        %v2602 = vmul.bf16 %v2586, 1045249613
        %v2603 = vmul.bf16 %v2587, 1045249613
        %v2604 = vmul.bf16 %v2588, 1045249613
        %v2605 = vmul.bf16 %v2589, 1045249613
        %v2606 = vmul.bf16 %v2590, 1045249613
        %v2607 = vmul.bf16 %v2591, 1045249613
        %v2608 = vmul.bf16 %v2592, 1045249613
        %v2609 = vmul.bf16 %v2593, 1045249613
        %v2610 = vmax.bf16 %v2578, %v2594
        %v2611 = vmax.bf16 %v2579, %v2595
        %v2612 = vmax.bf16 %v2580, %v2596
        %v2613 = vmax.bf16 %v2581, %v2597
        %v2614 = vmax.bf16 %v2582, %v2598
        %v2615 = vmax.bf16 %v2583, %v2599
        %v2616 = vmax.bf16 %v2584, %v2600
        %v2617 = vmax.bf16 %v2585, %v2601
        %v2618 = vmax.bf16 %v2586, %v2602
        %v2619 = vmax.bf16 %v2587, %v2603
        %v2620 = vmax.bf16 %v2588, %v2604
        %v2621 = vmax.bf16 %v2589, %v2605
        %v2622 = vmax.bf16 %v2590, %v2606
        %v2623 = vmax.bf16 %v2591, %v2607
        %v2624 = vmax.bf16 %v2592, %v2608
        %v2625 = vmax.bf16 %v2593, %v2609
        %v2626 = vld [vmem:[%s7] sm:$0x1]
        %s2627 = sld [smem:[#allocation2]]
        %v2628 = vstv %s2627
        %2629 = vmatprep.subr.bf16.mxu0 0
        %2630 = vmatpush1.bf16.xpose.msra.mxu0 %v2610
        %2631 = vmatprep.subr.bf16.mxu0 0
        %2632 = vmatpush1.bf16.xpose.msra.mxu0 %v2611
        %2633 = vmatprep.subr.bf16.mxu0 0
        %2634 = vmatpush1.bf16.xpose.msra.mxu0 %v2612
        %2635 = vmatprep.subr.bf16.mxu0 0
        %2636 = vmatpush1.bf16.xpose.msra.mxu0 %v2613
        %2637 = vmatprep.subr.bf16.mxu0 0
        %2638 = vmatpush1.bf16.xpose.msra.mxu0 %v2614
        %2639 = vmatprep.subr.bf16.mxu0 0
        %2640 = vmatpush1.bf16.xpose.msra.mxu0 %v2615
        %2641 = vmatprep.subr.bf16.mxu0 0
        %2642 = vmatpush1.bf16.xpose.msra.mxu0 %v2616
        %2643 = vmatprep.subr.bf16.mxu0 0
        %2644 = vmatpush1.bf16.xpose.msra.mxu0 %v2617
        %2645 = vmatprep.subr.bf16.mxu0 0
        %2646 = vmatpush1.bf16.xpose.msra.mxu0 %v2618
        %2647 = vmatprep.subr.bf16.mxu0 0
        %2648 = vmatpush1.bf16.xpose.msra.mxu0 %v2619
        %2649 = vmatprep.subr.bf16.mxu0 0
        %2650 = vmatpush1.bf16.xpose.msra.mxu0 %v2620
        %2651 = vmatprep.subr.bf16.mxu0 0
        %2652 = vmatpush1.bf16.xpose.msra.mxu0 %v2621
        %2653 = vmatprep.subr.bf16.mxu0 0
        %2654 = vmatpush1.bf16.xpose.msra.mxu0 %v2622
        %2655 = vmatprep.subr.bf16.mxu0 0
        %2656 = vmatpush1.bf16.xpose.msra.mxu0 %v2623
        %2657 = vmatprep.subr.bf16.mxu0 0
        %2658 = vmatpush1.bf16.xpose.msra.mxu0 %v2624
        %2659 = vmatprep.subr.bf16.mxu0 0
        %2660 = vmatpush1.bf16.xpose.msra.mxu0 %v2625
        %2661 = vmatprep.mubr.bf16.mxu0 0
        %2662 = vmatmul.mubr.bf16.gmra.mrb[0].mxu0 %v2626
        %v2663 = vpop.f32.mrb[0].mxu0
        %v2664 = vadd.f32 %v2628, %v2663
        %v2665 = vpop.f32.mrb[0].mxu0
        %v2666 = vadd.f32 %v2628, %v2665
        %v2667 = vpop.f32.mrb[0].mxu0
        %v2668 = vpop.f32.mrb[0].mxu0
        %2669 = vdwg.mxu0
        %v2670 = vxor.u32 %v2664, 2147483648
        %v2671 = vxor.u32 %v2666, 2147483648
        %v2672 = vmul.f32 %v2670, 1.442695
        %v2673 = vpow.pop %v2672
        %v2674 = vmul.f32 %v2671, 1.442695
        %v2675 = vpow.pop %v2674
        %v2676 = vadd.f32 %v2673, 1.0
        %v2677 = vadd.f32 %v2675, 1.0
        %v2678 = vrcp.pop %v2676
        %v2679 = vmul.f32 1.0, %v2678
        %v2680 = vrcp.pop %v2677
        %v2681 = vmul.f32 1.0, %v2680
        %v2684 = vcombine.low %v2679, %v2681
        %v2686 = vunpack.c.l.s4 1966171168
        %v2687 = vunpack.c.0.s8 %v2686
        %v2688 = vlaneseq
        %v2689 = vshrl.u32 %v2688, 7
        %v2690 = vsub.s32 %v2687, %v2689
        %v2691 = vrot.slane %v2684, %v2690
        %v2693 = vunpack.c.l.s4 1966171168
        %v2694 = vunpack.c.0.s8 %v2693
        %v2695 = vlaneseq
        %v2696 = vshrl.u32 %v2695, 7
        %v2697 = vsub.s32 %v2694, %v2696
        %v2698 = vrot.slane %v2691, %v2697
        %v2700 = vlaneseq
        %vm2701 = vcmp.ge.s32.totalorder %v2700, 0
        %vm2702 = vcmp.lt.s32.totalorder %v2700, 256
        %vm2703 = vmand %vm2701, %vm2702
        %2704 = vst.msk [vmem:[%s354] sm:$0x3] %vm2703, %v2698
        %s2705 = sand.u32 %s227, 1
        %s2706 = scalar_lea.sflag [#allocation5], %s2705
        %s2707 = sand.u32 %s227, 1
        %s2708 = smul.addr %s2707, 2
        %s2709 = scalar_lea.vmem [#allocation6], %s2708
        // Predicated region
        $region61: #{tpu_custom_call.1} parent=55 // pred_check
          %p2710 = pneg %p237
        $region62: #{tpu_custom_call.1} parent=55 // pred_check_branch
          %2712 = sbr.rel (%p2710) target = $region64
        $region63: #{tpu_custom_call.1} parent=55 // pred_region
          %s2713 = smul.u32 2, %s25
          %s2714 = ssub.s32 3, %s2713
          %p2715 = scmp.lt.s32.totalorder %s2714, 2
          %s2716 = scalar_select %p2715, %s2714, 2
          %s2717 = smul.u32 16, %s2716
          %s2719 = ssub.s32 32, %s2717
          %2720 = vsyncadd %s2706, %s2719
          %p2721 = scmp.ne.s32.totalorder 0, %s2717
          %s2722 = smul.addr %s2713, 16
          %s2723 = scalar_lea.hbm %s9, %s2722
          %s2724 = sshll.u32 %s2716, 4
          %s2725 = sshll.u32 %s2709, 4
          %s2726 = int_to_ptr.vmem [resolvable:$true] %s2725
          %2728 = dma.vmem_to_hbm [thread:$0]  (%p2721), %s2726, %s2724, %s2723, %s2706
        $region64: #{tpu_custom_call.1} parent=55 // pred_fallthru
          _
      $region56: #{tpu_custom_call.1} parent=5 // pred_fallthru
        _
      %p2729 = scmp.le.s32.totalorder 2, %s20
      // Predicated region
      $region65: #{tpu_custom_call.1} parent=5 // pred_check
        %p2730 = pneg %p2729
      $region66: #{tpu_custom_call.1} parent=5 // pred_check_branch
        %2732 = sbr.rel (%p2730) target = $region68
      $region67: #{tpu_custom_call.1} parent=5 // pred_region
        %s2733 = ssub.s32 %s20, 2
        // Predicated region
        $region69: #{tpu_custom_call.1} parent=67 // pred_check
          %p2734 = pneg %p243
        $region70: #{tpu_custom_call.1} parent=67 // pred_check_branch
          %2736 = sbr.rel (%p2734) target = $region72
        $region71: #{tpu_custom_call.1} parent=67 // pred_region
          %s2737 = sand.u32 %s228, 1
          %s2738 = scalar_lea.sflag [#allocation5], %s2737
          %s2739 = sand.u32 %s228, 1
          %s2740 = smul.addr %s2739, 2
          %s2741 = scalar_lea.vmem [#allocation6], %s2740
          %2742 = dma.done %s2738, 32
        $region72: #{tpu_custom_call.1} parent=67 // pred_fallthru
          _
      $region68: #{tpu_custom_call.1} parent=5 // pred_fallthru
        _
    $region6: #{tpu_custom_call.1} parent=1 // loop_footer
      %s24 = sadd.s32 1, %s20
    $region7: #{tpu_custom_call.1} parent=1 // loop_footer_branch
      %19 = sbr.rel target = $region3
    $region8: #{tpu_custom_call.1} parent=1 // loop_exit
      _
    %2743 = vsyncpa [#allocation4], 1
    %s2744 = scalar_lea.sflag [#allocation4], 1
    %2745 = vsyncpa %s2744, 1
    %2746 = vsyncpa [#allocation5], 1
    %s2747 = scalar_lea.sflag [#allocation5], 1
    %2748 = vsyncpa %s2747, 1

</llo_original>
